<compile_context>
chip_gen: v6e
topology: v6e:2x2x1
jax: 0.10.0
libtpu: 0.0.40
codegen_flags: <defaults>
</compile_context>

<pallas_src>
import jax
import jax.numpy as jnp
from jax.experimental import pallas as pl
from jax.experimental.pallas import tpu as pltpu


# ---- fixed module dimensions -------------------------------------------------
_IN = 4          # input_size
_H1 = 64         # hidden 1
_H2 = 32         # hidden 2

# ---- weight-slab layout (row offsets, all 8-aligned; slab is (128, 128) f32) --
_W1_ROW = 0      # rows 0..3    cols 0..63   : W1 (4, 64)
_B1_ROW = 8      # row  8       cols 0..63   : b1 (64,)
_W2_ROW = 16     # rows 16..79  cols 0..31   : W2 (64, 32)
_B2_ROW = 80     # row  80      cols 0..31   : b2 (32,)
_W3_ROW = 88     # rows 88..119 cols 0..out  : W3 (32, out)
_B3_ROW = 120    # row 120      cols 0..out  : b3 (out,)
_SLAB_ROWS = 128
_SLAB_COLS = 128

_MAX_BATCH_TILE = 2048   # lane-padded f32 footprint stays well under 32 MiB scoped VMEM


def _round_up(n, m):
    return ((n + m - 1) // m) * m


def _pick_batch_tile(batch):
    """Adaptive tile: multiple of 8, >=4 grid steps when batch allows, <=2048 rows."""
    b8 = _round_up(batch, 8)
    if b8 <= 256:
        return b8
    tile = _round_up(pl.cdiv(b8, 4), 8)   # aim for ~4 grid steps (v7x megacore + pipelining)
    return min(max(tile, 256), _MAX_BATCH_TILE)


def _mlp_kernel(x_ref, slab_ref, o_ref):
    out_size = o_ref.shape[-1]                            # static (3)
    x = x_ref[...]                                        # (tile, 4)

    # ---- layer 1: K=4 -> VPU broadcast-FMA, skip the MXU entirely ----
    w1 = slab_ref[_W1_ROW:_W1_ROW + _IN, :_H1]            # (4, 64)
    b1 = slab_ref[_B1_ROW:_B1_ROW + 1, :_H1]              # (1, 64)
    h1 = b1
    for k in range(_IN):                                  # statically unrolled
        h1 = h1 + x[:, k:k + 1] * w1[k:k + 1, :]
    h1 = jnp.maximum(h1, 0.0)                             # (tile, 64)

    # ---- layer 2: MXU ----
    w2 = slab_ref[_W2_ROW:_W2_ROW + _H1, :_H2]            # (64, 32)
    b2 = slab_ref[_B2_ROW:_B2_ROW + 1, :_H2]              # (1, 32)
    h2 = jnp.maximum(
        jnp.dot(h1, w2, preferred_element_type=jnp.float32) + b2, 0.0
    )                                                     # (tile, 32)

    # ---- layer 3: MXU, narrow (out_size lanes only) ----
    w3 = slab_ref[_W3_ROW:_W3_ROW + _H2, :out_size]       # (32, out)
    b3 = slab_ref[_B3_ROW:_B3_ROW + 1, :out_size]         # (1, out)
    y = jnp.dot(h2, w3, preferred_element_type=jnp.float32) + b3

    o_ref[...] = y.astype(o_ref.dtype)                    # (tile, out) store


def pack_params(params):
    """Pack w1,b1,w2,b2,w3,b3 into one zero-padded (128, 128) f32 slab.

    Call ONCE per parameter set and reuse the slab across forwards.
    """
    out_size = params["w3"].shape[1]
    assert out_size <= _SLAB_COLS
    slab = jnp.zeros((_SLAB_ROWS, _SLAB_COLS), jnp.float32)
    slab = slab.at[_W1_ROW:_W1_ROW + _IN, :_H1].set(params["w1"].astype(jnp.float32))
    slab = slab.at[_B1_ROW, :_H1].set(params["b1"].reshape(_H1).astype(jnp.float32))
    slab = slab.at[_W2_ROW:_W2_ROW + _H1, :_H2].set(params["w2"].astype(jnp.float32))
    slab = slab.at[_B2_ROW, :_H2].set(params["b2"].reshape(_H2).astype(jnp.float32))
    slab = slab.at[_W3_ROW:_W3_ROW + _H2, :out_size].set(params["w3"].astype(jnp.float32))
    slab = slab.at[_B3_ROW, :out_size].set(params["b3"].reshape(out_size).astype(jnp.float32))
    return slab


def residual_mlp_forward(x, slab, out_size, *, batch_tile=None):
    """x: (B, 4) f32.  slab: pre-packed (128, 128) f32 weight slab.  out_size static."""
    batch, in_size = x.shape
    assert in_size == _IN

    if batch_tile is None:
        batch_tile = _pick_batch_tile(batch)
    batch_tile = _round_up(max(int(batch_tile), 8), 8)

    grid_n = pl.cdiv(batch, batch_tile)
    batch_pad = grid_n * batch_tile
    if batch_pad != batch:
        # pad the tail instead of collapsing to one mega-tile (keeps pipelining
        # / megacore and bounds VMEM for large non-divisible batches)
        x = jnp.pad(x, ((0, batch_pad - batch), (0, 0)))

    out = pl.pallas_call(
        _mlp_kernel,
        out_shape=jax.ShapeDtypeStruct((batch_pad, out_size), jnp.float32),
        grid_spec=pltpu.PrefetchScalarGridSpec(
            num_scalar_prefetch=0,
            grid=(grid_n,),
            in_specs=[
                pl.BlockSpec((batch_tile, _IN), lambda i: (i, 0)),          # x tile
                pl.BlockSpec((_SLAB_ROWS, _SLAB_COLS), lambda i: (0, 0)),   # weight slab (resident)
            ],
            out_specs=pl.BlockSpec((batch_tile, out_size), lambda i: (i, 0)),
        ),
        compiler_params=pltpu.CompilerParams(
            dimension_semantics=("parallel",),    # batch axis -> megacore on v7x
            vmem_limit_bytes=32 * 1024 * 1024,    # raise v5e's 16 MiB default; <64 MiB v7x physical
        ),
    )(x, slab)

    if batch_pad != batch:
        out = out[:batch]
    return out


def init_params(key, input_size=4, hidden1=64, hidden2=32, output_size=3):
    """Deterministic synthetic init (PyTorch-like uniform fan-in scaling)."""
    keys = jax.random.split(key, 6)

    def linear(kw, kb, fan_in, fan_out):
        bound = 1.0 / (fan_in ** 0.5)
        # stored as (in, out) = transpose of torch's (out, in)
        w = jax.random.uniform(kw, (fan_in, fan_out), jnp.float32, -bound, bound)
        b = jax.random.uniform(kb, (1, fan_out), jnp.float32, -bound, bound)
        return w, b

    w1, b1 = linear(keys[0], keys[1], input_size, hidden1)
    w2, b2 = linear(keys[2], keys[3], hidden1, hidden2)
    w3, b3 = linear(keys[4], keys[5], hidden2, output_size)
    return {"w1": w1, "b1": b1, "w2": w2, "b2": b2, "w3": w3, "b3": b3}


def reference_forward(x, p):
    h1 = jnp.maximum(x @ p["w1"] + p["b1"], 0.0)
    h2 = jnp.maximum(h1 @ p["w2"] + p["b2"], 0.0)
    return h2 @ p["w3"] + p["b3"]


if __name__ == "__main__":
    key = jax.random.PRNGKey(0)
    k_param, k_x = jax.random.split(key)

    input_size, output_size = 4, 3
    batch = 1000  # not a multiple of 8/tile -> exercises the pad-and-slice tail path; grid=(4,)

    params = init_params(k_param, input_size=input_size, output_size=output_size)
    x = jax.random.normal(k_x, (batch, input_size), dtype=jnp.float32)

    # pack weights ONCE; jit the forward (out_size is static)
    slab = pack_params(params)
    fwd = jax.jit(residual_mlp_forward, static_argnums=(2,))

    y = jax.block_until_ready(fwd(x, slab, output_size))
    y_ref = jax.block_until_ready(reference_forward(x, params))

    assert y.shape == (batch, output_size)
    assert jnp.allclose(y, y_ref, atol=1e-5, rtol=1e-5)

    print("KERNEL_OK")
</pallas_src>

<mosaic_0001>
module attributes {stable_mosaic.version = 11 : i64} {
  func.func @_mlp_kernel(%arg0: i32, %arg1: memref<256x4xf32, #tpu.memory_space<vmem>>, %arg2: memref<128x128xf32, #tpu.memory_space<vmem>>, %arg3: memref<256x3xf32, #tpu.memory_space<vmem>>) attributes {dimension_semantics = [#tpu.dimension_semantics<parallel>], iteration_bounds = array<i64: 4>, scalar_prefetch = 0 : i64, scratch_operands = 0 : i64, tpu.core_type = #tpu.core_type<tc>, window_params = [{transform_indices = @transform_0, window_bounds = array<i64: 256, 4>}, {pipeline_mode = #tpu.pipeline_mode<synchronous>, transform_indices = @transform_1, window_bounds = array<i64: 128, 128>}, {transform_indices = @transform_2, window_bounds = array<i64: 256, 3>}]} {
    %c0 = arith.constant 0 : index
    %c0_0 = arith.constant 0 : index
    %0 = vector.load %arg1[%c0, %c0_0] : memref<256x4xf32, #tpu.memory_space<vmem>>, vector<256x4xf32>
    %c0_1 = arith.constant 0 : index
    %c0_2 = arith.constant 0 : index
    %1 = vector.load %arg2[%c0_1, %c0_2] : memref<128x128xf32, #tpu.memory_space<vmem>>, vector<4x64xf32>
    %c8 = arith.constant 8 : index
    %c0_3 = arith.constant 0 : index
    %2 = vector.load %arg2[%c8, %c0_3] : memref<128x128xf32, #tpu.memory_space<vmem>>, vector<1x64xf32>
    %3 = vector.extract_strided_slice %0 {offsets = [0, 0], sizes = [256, 1], strides = [1, 1]} : vector<256x4xf32> to vector<256x1xf32>
    %4 = vector.extract_strided_slice %1 {offsets = [0, 0], sizes = [1, 64], strides = [1, 1]} : vector<4x64xf32> to vector<1x64xf32>
    %5 = vector.broadcast %3 : vector<256x1xf32> to vector<256x64xf32>
    %6 = vector.broadcast %4 : vector<1x64xf32> to vector<256x64xf32>
    %7 = arith.mulf %5, %6 : vector<256x64xf32>
    %8 = vector.broadcast %2 : vector<1x64xf32> to vector<256x64xf32>
    %9 = arith.addf %8, %7 : vector<256x64xf32>
    %10 = vector.extract_strided_slice %0 {offsets = [0, 1], sizes = [256, 1], strides = [1, 1]} : vector<256x4xf32> to vector<256x1xf32>
    %11 = vector.extract_strided_slice %1 {offsets = [1, 0], sizes = [1, 64], strides = [1, 1]} : vector<4x64xf32> to vector<1x64xf32>
    %12 = vector.broadcast %10 : vector<256x1xf32> to vector<256x64xf32>
    %13 = vector.broadcast %11 : vector<1x64xf32> to vector<256x64xf32>
    %14 = arith.mulf %12, %13 : vector<256x64xf32>
    %15 = arith.addf %9, %14 : vector<256x64xf32>
    %16 = vector.extract_strided_slice %0 {offsets = [0, 2], sizes = [256, 1], strides = [1, 1]} : vector<256x4xf32> to vector<256x1xf32>
    %17 = vector.extract_strided_slice %1 {offsets = [2, 0], sizes = [1, 64], strides = [1, 1]} : vector<4x64xf32> to vector<1x64xf32>
    %18 = vector.broadcast %16 : vector<256x1xf32> to vector<256x64xf32>
    %19 = vector.broadcast %17 : vector<1x64xf32> to vector<256x64xf32>
    %20 = arith.mulf %18, %19 : vector<256x64xf32>
    %21 = arith.addf %15, %20 : vector<256x64xf32>
    %22 = vector.extract_strided_slice %0 {offsets = [0, 3], sizes = [256, 1], strides = [1, 1]} : vector<256x4xf32> to vector<256x1xf32>
    %23 = vector.extract_strided_slice %1 {offsets = [3, 0], sizes = [1, 64], strides = [1, 1]} : vector<4x64xf32> to vector<1x64xf32>
    %24 = vector.broadcast %22 : vector<256x1xf32> to vector<256x64xf32>
    %25 = vector.broadcast %23 : vector<1x64xf32> to vector<256x64xf32>
    %26 = arith.mulf %24, %25 : vector<256x64xf32>
    %27 = arith.addf %21, %26 : vector<256x64xf32>
    %cst = arith.constant 0.000000e+00 : f32
    %28 = vector.broadcast %cst : f32 to vector<256x64xf32>
    %29 = arith.maximumf %27, %28 : vector<256x64xf32>
    %c16 = arith.constant 16 : index
    %c0_4 = arith.constant 0 : index
    %30 = vector.load %arg2[%c16, %c0_4] : memref<128x128xf32, #tpu.memory_space<vmem>>, vector<64x32xf32>
    %c80 = arith.constant 80 : index
    %c0_5 = arith.constant 0 : index
    %31 = vector.load %arg2[%c80, %c0_5] : memref<128x128xf32, #tpu.memory_space<vmem>>, vector<1x32xf32>
    %cst_6 = arith.constant dense<0.000000e+00> : vector<256x32xf32>
    %32 = tpu.matmul %29, %30, %cst_6 {dimension_numbers = #tpu.dot_dimension_numbers<[1], [0], [0], [1], [0, 0, 1, 1], [], []>} : vector<256x64xf32>, vector<64x32xf32>, vector<256x32xf32> -> vector<256x32xf32>
    %33 = vector.broadcast %31 : vector<1x32xf32> to vector<256x32xf32>
    %34 = arith.addf %32, %33 : vector<256x32xf32>
    %cst_7 = arith.constant 0.000000e+00 : f32
    %35 = vector.broadcast %cst_7 : f32 to vector<256x32xf32>
    %36 = arith.maximumf %34, %35 : vector<256x32xf32>
    %c88 = arith.constant 88 : index
    %c0_8 = arith.constant 0 : index
    %37 = vector.load %arg2[%c88, %c0_8] : memref<128x128xf32, #tpu.memory_space<vmem>>, vector<32x3xf32>
    %c120 = arith.constant 120 : index
    %c0_9 = arith.constant 0 : index
    %38 = vector.load %arg2[%c120, %c0_9] : memref<128x128xf32, #tpu.memory_space<vmem>>, vector<1x3xf32>
    %cst_10 = arith.constant dense<0.000000e+00> : vector<256x3xf32>
    %39 = tpu.matmul %36, %37, %cst_10 {dimension_numbers = #tpu.dot_dimension_numbers<[1], [0], [0], [1], [0, 0, 1, 1], [], []>} : vector<256x32xf32>, vector<32x3xf32>, vector<256x3xf32> -> vector<256x3xf32>
    %40 = vector.broadcast %38 : vector<1x3xf32> to vector<256x3xf32>
    %41 = arith.addf %39, %40 : vector<256x3xf32>
    %c0_11 = arith.constant 0 : index
    %c0_12 = arith.constant 0 : index
    %42 = vector.load %arg3[%c0_11, %c0_12] : memref<256x3xf32, #tpu.memory_space<vmem>>, vector<256x3xf32>
    tpu.vector_store %arg3[%c0_11, %c0_12], %41 {strides = array<i32>} : memref<256x3xf32, #tpu.memory_space<vmem>>, vector<256x3xf32>,
    return
  }
  func.func @transform_0(%arg0: i32) -> (i32, i32) {
    %c0_i32 = arith.constant 0 : i32
    %c0_i32_0 = arith.constant 0 : i32
    return %arg0, %c0_i32 : i32, i32
  }
  func.func @transform_1(%arg0: i32) -> (i32, i32) {
    %c0_i32 = arith.constant 0 : i32
    %c0_i32_0 = arith.constant 0 : i32
    %c0_i32_1 = arith.constant 0 : i32
    return %c0_i32, %c0_i32_0 : i32, i32
  }
  func.func @transform_2(%arg0: i32) -> (i32, i32) {
    %c0_i32 = arith.constant 0 : i32
    %c0_i32_0 = arith.constant 0 : i32
    return %arg0, %c0_i32 : i32, i32
  }
}

</mosaic_0001>

<llo_original>
// kernel: residual_mlp_forward.1
$region0: #{residual_mlp_forward.1}
  #allocation0 [shape = 'u32[]', space=smem, size = 0x4, offset = 0x4, fixed_abs, tag = 'smem constant byte address 0x4 - core index']
  #allocation1 [shape = 'u32[144,128]{1,0:T(1,128)}', space=vmem, size = 0x12000, scoped, tag = 'internal scratch']
  %s0 = inlined_call_operand.vmem [shape: f32[1024,4], index: 0, kind: input, shape index: {}]
  %s1 = inlined_call_operand.vmem [shape: f32[128,128], index: 1, kind: input, shape index: {}]
  %s2 = inlined_call_operand.vmem [shape: f32[1024,3], index: 2, kind: output, shape index: {}]
  %s3 = sld [smem:[#allocation0]]
  $region41: #{residual_mlp_forward.1} parent=0
    _
  %s5 = ssub.s32 1, %s3
  %s6 = scalar_select 0, %s5, %s3
  loop: start=0, step=1, limit=6
  $region2: #{residual_mlp_forward.1} parent=0 // loop_pre_header
    _
  $region3: #{residual_mlp_forward.1} parent=0 // loop_header
    %s8 = sphi 0, %s12
    %p9 = scmp.ge.s32.totalorder %s8, 6
    %s18 = sphi 0, %s20
    %s21 = sphi 0, %s18
    %s22 = sphi 0, %s21
    %s38 = sphi 0, %s22
    %s42 = sphi 0, %s42
    %s44 = sphi 0, %s42
    %s45 = sphi 0, %s44
    %s59 = sphi 0, %s45
    %s65 = sphi 0, %s67
    %s68 = sphi 0, %s65
    %s69 = sphi 0, %s68
    %s85 = sphi 0, %s69
  $region4: #{residual_mlp_forward.1} parent=0 // loop_header_branch
    %11 = sbr.rel (%p9) target = $region8
  $region5: #{residual_mlp_forward.1} parent=0 // loop_body
    %s13 = ssub.s32 %s8, 1
    %s14 = ssub.s32 %s8, 2
    %s15 = sadd.s32 %s8, 1
    %s16 = ssub.s32 %s8, %s15
    %p17 = scmp.eq.s32.totalorder %s16, 0
    %s19 = sadd.s32 %s18, 1
    %s20 = scalar_select %p17, %s18, %s19
    %p23 = pneg %p17
    %p24 = scmp.eq.s32.totalorder %s8, 3
    %p25 = por %p23, %p24
    %p26 = scmp.ne.s32.totalorder %s18, %s21
    %p27 = scmp.eq.s32.totalorder %s8, 0
    %p28 = por %p26, %p27
    %p29 = scmp.ne.s32.totalorder %s18, %s21
    %p30 = scmp.eq.s32.totalorder %s13, 3
    %p31 = por %p29, %p30
    %p32 = scmp.ne.s32.totalorder %s21, %s22
    %p33 = scmp.eq.s32.totalorder %s13, 0
    %p34 = por %p32, %p33
    %p35 = scmp.ne.s32.totalorder %s21, %s22
    %p36 = scmp.eq.s32.totalorder %s14, 3
    %p37 = por %p35, %p36
    %p39 = scmp.ne.s32.totalorder %s22, %s38
    %p40 = scmp.eq.s32.totalorder %s14, 0
    %p41 = por %p39, %p40
    %s43 = sadd.s32 %s42, 1
    %p46 = scmp.eq.s32.totalorder %s8, 3
    %p47 = scmp.ne.s32.totalorder %s42, %s44
    %p48 = scmp.eq.s32.totalorder %s8, 0
    %p49 = por %p47, %p48
    %p50 = scmp.ne.s32.totalorder %s42, %s44
    %p51 = scmp.eq.s32.totalorder %s13, 3
    %p52 = por %p50, %p51
    %p53 = scmp.ne.s32.totalorder %s44, %s45
    %p54 = scmp.eq.s32.totalorder %s13, 0
    %p55 = por %p53, %p54
    %p56 = scmp.ne.s32.totalorder %s44, %s45
    %p57 = scmp.eq.s32.totalorder %s14, 3
    %p58 = por %p56, %p57
    %p60 = scmp.ne.s32.totalorder %s45, %s59
    %p61 = scmp.eq.s32.totalorder %s14, 0
    %p62 = por %p60, %p61
    %s63 = ssub.s32 %s8, %s15
    %p64 = scmp.eq.s32.totalorder %s63, 0
    %s66 = sadd.s32 %s65, 1
    %s67 = scalar_select %p64, %s65, %s66
    %p70 = pneg %p64
    %p71 = scmp.eq.s32.totalorder %s8, 3
    %p72 = por %p70, %p71
    %p73 = scmp.ne.s32.totalorder %s65, %s68
    %p74 = scmp.eq.s32.totalorder %s8, 0
    %p75 = por %p73, %p74
    %p76 = scmp.ne.s32.totalorder %s65, %s68
    %p77 = scmp.eq.s32.totalorder %s13, 3
    %p78 = por %p76, %p77
    %p79 = scmp.ne.s32.totalorder %s68, %s69
    %p80 = scmp.eq.s32.totalorder %s13, 0
    %p81 = por %p79, %p80
    %p82 = scmp.ne.s32.totalorder %s68, %s69
    %p83 = scmp.eq.s32.totalorder %s14, 3
    %p84 = por %p82, %p83
    %p86 = scmp.ne.s32.totalorder %s69, %s85
    %p87 = scmp.eq.s32.totalorder %s14, 0
    %p88 = por %p86, %p87
    %p89 = scmp.le.s32.totalorder 1, %s8
    %p90 = scmp.lt.s32.totalorder %s8, 5
    %p91 = pnand %p89, %p90
    %p92 = pneg %p91
    // Predicated region
    $region9: #{residual_mlp_forward.1} parent=5 // pred_check
      _
    $region10: #{residual_mlp_forward.1} parent=5 // pred_check_branch
      %94 = sbr.rel (%p91) target = $region12
    $region11: #{residual_mlp_forward.1} parent=5 // pred_region
      %s95 = ssub.s32 %s8, 1
      // Predicated region
      $region13: #{residual_mlp_forward.1} parent=11 // pred_check
        %p96 = pneg %p55
      $region14: #{residual_mlp_forward.1} parent=11 // pred_check_branch
        %98 = sbr.rel (%p96) target = $region16
      $region15: #{residual_mlp_forward.1} parent=11 // pred_region
        _
      $region16: #{residual_mlp_forward.1} parent=11 // pred_fallthru
        _
    $region12: #{residual_mlp_forward.1} parent=5 // pred_fallthru
      _
    %p99 = scmp.lt.s32.totalorder %s8, 4
    // Predicated region
    $region17: #{residual_mlp_forward.1} parent=5 // pred_check
      %p100 = pneg %p99
    $region18: #{residual_mlp_forward.1} parent=5 // pred_check_branch
      %102 = sbr.rel (%p100) target = $region20
    $region19: #{residual_mlp_forward.1} parent=5 // pred_region
      // Predicated region
      $region21: #{residual_mlp_forward.1} parent=19 // pred_check
        %p103 = pneg %p28
      $region22: #{residual_mlp_forward.1} parent=19 // pred_check_branch
        %105 = sbr.rel (%p103) target = $region24
      $region23: #{residual_mlp_forward.1} parent=19 // pred_region
        %s106 = smul.u32 32, %s8
        %p107 = scmp.lt.s32.totalorder %s106, 127
        %s108 = scalar_select %p107, %s106, 127
        %s109 = smul.addr %s108, 8
        %s110 = scalar_lea.vmem %s0, %s109
        %s111 = smul.u32 32, %s8
      $region24: #{residual_mlp_forward.1} parent=19 // pred_fallthru
        _
    $region20: #{residual_mlp_forward.1} parent=5 // pred_fallthru
      _
    %p112 = scmp.le.s32.totalorder 1, %s8
    %p113 = scmp.lt.s32.totalorder %s8, 5
    %p114 = pnand %p112, %p113
    %p115 = pneg %p114
    // Predicated region
    $region25: #{residual_mlp_forward.1} parent=5 // pred_check
      _
    $region26: #{residual_mlp_forward.1} parent=5 // pred_check_branch
      %117 = sbr.rel (%p114) target = $region28
    $region27: #{residual_mlp_forward.1} parent=5 // pred_region
      %s118 = ssub.s32 %s8, 1
      %s119 = smul.u32 32, %s13
      %p120 = scmp.lt.s32.totalorder %s119, 127
      %s121 = scalar_select %p120, %s119, 127
      %s122 = smul.addr %s121, 8
      %s123 = scalar_lea.vmem %s0, %s122
      %p124 = pneg %p34
      %p125 = pneg %p31
      %p126 = pneg %p55
      %p127 = pneg %p52
      %p128 = pneg %p81
      %p129 = pneg %p78
      %s130 = smul.u32 32, %s13
      %p131 = scmp.lt.s32.totalorder %s130, 127
      %s132 = scalar_select %p131, %s130, 127
      %s133 = smul.addr %s132, 8
      %s134 = scalar_lea.vmem %s2, %s133
      %s135 = smul.u32 32, %s13
      %p136 = scmp.lt.s32.totalorder %s135, 127
      %s137 = scalar_select %p136, %s135, 127
      %s138 = smul.addr %s137, 8
      %s139 = scalar_lea.vmem %s0, %s138
      %s140 = smul.u32 32, %s13
      %s141 = smul.u32 32, %s13
      %p142 = scmp.lt.s32.totalorder %s141, 127
      %s143 = scalar_select %p142, %s141, 127
      %s144 = smul.addr %s143, 8
      %s145 = scalar_lea.vmem %s2, %s144
      %s146 = smul.u32 32, %s13
      %v147 = vld [vmem:[%s139] sm:$0xff]
      %v148 = vld [vmem:[%s139 + $0x8] sm:$0xff]
      %v149 = vld [vmem:[%s139 + $0x10] sm:$0xff]
      %v150 = vld [vmem:[%s139 + $0x18] sm:$0xff]
      %v151 = vld [vmem:[%s139 + $0x20] sm:$0xff]
      %v152 = vld [vmem:[%s139 + $0x28] sm:$0xff]
      %v153 = vld [vmem:[%s139 + $0x30] sm:$0xff]
      %v154 = vld [vmem:[%s139 + $0x38] sm:$0xff]
      %v155 = vld [vmem:[%s139 + $0x40] sm:$0xff]
      %v156 = vld [vmem:[%s139 + $0x48] sm:$0xff]
      %v157 = vld [vmem:[%s139 + $0x50] sm:$0xff]
      %v158 = vld [vmem:[%s139 + $0x58] sm:$0xff]
      %v159 = vld [vmem:[%s139 + $0x60] sm:$0xff]
      %v160 = vld [vmem:[%s139 + $0x68] sm:$0xff]
      %v161 = vld [vmem:[%s139 + $0x70] sm:$0xff]
      %v162 = vld [vmem:[%s139 + $0x78] sm:$0xff]
      %v163 = vld [vmem:[%s139 + $0x80] sm:$0xff]
      %v164 = vld [vmem:[%s139 + $0x88] sm:$0xff]
      %v165 = vld [vmem:[%s139 + $0x90] sm:$0xff]
      %v166 = vld [vmem:[%s139 + $0x98] sm:$0xff]
      %v167 = vld [vmem:[%s139 + $0xa0] sm:$0xff]
      %v168 = vld [vmem:[%s139 + $0xa8] sm:$0xff]
      %v169 = vld [vmem:[%s139 + $0xb0] sm:$0xff]
      %v170 = vld [vmem:[%s139 + $0xb8] sm:$0xff]
      %v171 = vld [vmem:[%s139 + $0xc0] sm:$0xff]
      %v172 = vld [vmem:[%s139 + $0xc8] sm:$0xff]
      %v173 = vld [vmem:[%s139 + $0xd0] sm:$0xff]
      %v174 = vld [vmem:[%s139 + $0xd8] sm:$0xff]
      %v175 = vld [vmem:[%s139 + $0xe0] sm:$0xff]
      %v176 = vld [vmem:[%s139 + $0xe8] sm:$0xff]
      %v177 = vld [vmem:[%s139 + $0xf0] sm:$0xff]
      %v178 = vld [vmem:[%s139 + $0xf8] sm:$0xff]
      %v179 = vld [vmem:[%s1] sm:$0xf]
      %v180 = vld [vmem:[%s1 + $0x8] sm:$0x1]
      %182 = vset.pattern.permute.xlu0 0
      %183 = vperm.xlu0 %182, %v147
      %v184 = vpop.permute.xlu0 %183
      %187 = vset.pattern.permute.xlu0 0
      %188 = vperm.xlu0 %187, %v148
      %v189 = vpop.permute.xlu0 %188
      %192 = vset.pattern.permute.xlu0 0
      %193 = vperm.xlu0 %192, %v149
      %v194 = vpop.permute.xlu0 %193
      %197 = vset.pattern.permute.xlu0 0
      %198 = vperm.xlu0 %197, %v150
      %v199 = vpop.permute.xlu0 %198
      %202 = vset.pattern.permute.xlu0 0
      %203 = vperm.xlu0 %202, %v151
      %v204 = vpop.permute.xlu0 %203
      %207 = vset.pattern.permute.xlu0 0
      %208 = vperm.xlu0 %207, %v152
      %v209 = vpop.permute.xlu0 %208
      %212 = vset.pattern.permute.xlu0 0
      %213 = vperm.xlu0 %212, %v153
      %v214 = vpop.permute.xlu0 %213
      %217 = vset.pattern.permute.xlu0 0
      %218 = vperm.xlu0 %217, %v154
      %v219 = vpop.permute.xlu0 %218
      %222 = vset.pattern.permute.xlu0 0
      %223 = vperm.xlu0 %222, %v155
      %v224 = vpop.permute.xlu0 %223
      %227 = vset.pattern.permute.xlu0 0
      %228 = vperm.xlu0 %227, %v156
      %v229 = vpop.permute.xlu0 %228
      %232 = vset.pattern.permute.xlu0 0
      %233 = vperm.xlu0 %232, %v157
      %v234 = vpop.permute.xlu0 %233
      %237 = vset.pattern.permute.xlu0 0
      %238 = vperm.xlu0 %237, %v158
      %v239 = vpop.permute.xlu0 %238
      %242 = vset.pattern.permute.xlu0 0
      %243 = vperm.xlu0 %242, %v159
      %v244 = vpop.permute.xlu0 %243
      %247 = vset.pattern.permute.xlu0 0
      %248 = vperm.xlu0 %247, %v160
      %v249 = vpop.permute.xlu0 %248
      %252 = vset.pattern.permute.xlu0 0
      %253 = vperm.xlu0 %252, %v161
      %v254 = vpop.permute.xlu0 %253
      %257 = vset.pattern.permute.xlu0 0
      %258 = vperm.xlu0 %257, %v162
      %v259 = vpop.permute.xlu0 %258
      %262 = vset.pattern.permute.xlu0 0
      %263 = vperm.xlu0 %262, %v163
      %v264 = vpop.permute.xlu0 %263
      %267 = vset.pattern.permute.xlu0 0
      %268 = vperm.xlu0 %267, %v164
      %v269 = vpop.permute.xlu0 %268
      %272 = vset.pattern.permute.xlu0 0
      %273 = vperm.xlu0 %272, %v165
      %v274 = vpop.permute.xlu0 %273
      %277 = vset.pattern.permute.xlu0 0
      %278 = vperm.xlu0 %277, %v166
      %v279 = vpop.permute.xlu0 %278
      %282 = vset.pattern.permute.xlu0 0
      %283 = vperm.xlu0 %282, %v167
      %v284 = vpop.permute.xlu0 %283
      %287 = vset.pattern.permute.xlu0 0
      %288 = vperm.xlu0 %287, %v168
      %v289 = vpop.permute.xlu0 %288
      %292 = vset.pattern.permute.xlu0 0
      %293 = vperm.xlu0 %292, %v169
      %v294 = vpop.permute.xlu0 %293
      %297 = vset.pattern.permute.xlu0 0
      %298 = vperm.xlu0 %297, %v170
      %v299 = vpop.permute.xlu0 %298
      %302 = vset.pattern.permute.xlu0 0
      %303 = vperm.xlu0 %302, %v171
      %v304 = vpop.permute.xlu0 %303
      %307 = vset.pattern.permute.xlu0 0
      %308 = vperm.xlu0 %307, %v172
      %v309 = vpop.permute.xlu0 %308
      %312 = vset.pattern.permute.xlu0 0
      %313 = vperm.xlu0 %312, %v173
      %v314 = vpop.permute.xlu0 %313
      %317 = vset.pattern.permute.xlu0 0
      %318 = vperm.xlu0 %317, %v174
      %v319 = vpop.permute.xlu0 %318
      %322 = vset.pattern.permute.xlu0 0
      %323 = vperm.xlu0 %322, %v175
      %v324 = vpop.permute.xlu0 %323
      %327 = vset.pattern.permute.xlu0 0
      %328 = vperm.xlu0 %327, %v176
      %v329 = vpop.permute.xlu0 %328
      %332 = vset.pattern.permute.xlu0 0
      %333 = vperm.xlu0 %332, %v177
      %v334 = vpop.permute.xlu0 %333
      %337 = vset.pattern.permute.xlu0 0
      %338 = vperm.xlu0 %337, %v178
      %v339 = vpop.permute.xlu0 %338
      %v341 = vlaneseq
      %v342 = vshrl.u32 %v341, 7
      %v343 = vsub.s32 0, %v342
      %v344 = vrot.slane %v179, %v343
      %v345 = vmul.f32 %v184, %v344
      %v346 = vmul.f32 %v189, %v344
      %v347 = vmul.f32 %v194, %v344
      %v348 = vmul.f32 %v199, %v344
      %v349 = vmul.f32 %v204, %v344
      %v350 = vmul.f32 %v209, %v344
      %v351 = vmul.f32 %v214, %v344
      %v352 = vmul.f32 %v219, %v344
      %v353 = vmul.f32 %v224, %v344
      %v354 = vmul.f32 %v229, %v344
      %v355 = vmul.f32 %v234, %v344
      %v356 = vmul.f32 %v239, %v344
      %v357 = vmul.f32 %v244, %v344
      %v358 = vmul.f32 %v249, %v344
      %v359 = vmul.f32 %v254, %v344
      %v360 = vmul.f32 %v259, %v344
      %v361 = vmul.f32 %v264, %v344
      %v362 = vmul.f32 %v269, %v344
      %v363 = vmul.f32 %v274, %v344
      %v364 = vmul.f32 %v279, %v344
      %v365 = vmul.f32 %v284, %v344
      %v366 = vmul.f32 %v289, %v344
      %v367 = vmul.f32 %v294, %v344
      %v368 = vmul.f32 %v299, %v344
      %v369 = vmul.f32 %v304, %v344
      %v370 = vmul.f32 %v309, %v344
      %v371 = vmul.f32 %v314, %v344
      %v372 = vmul.f32 %v319, %v344
      %v373 = vmul.f32 %v324, %v344
      %v374 = vmul.f32 %v329, %v344
      %v375 = vmul.f32 %v334, %v344
      %v376 = vmul.f32 %v339, %v344
      %v377 = vlaneseq
      %v378 = vshrl.u32 %v377, 7
      %v379 = vsub.s32 0, %v378
      %v380 = vrot.slane %v180, %v379
      %v381 = vadd.f32 %v380, %v345
      %v382 = vadd.f32 %v380, %v346
      %v383 = vadd.f32 %v380, %v347
      %v384 = vadd.f32 %v380, %v348
      %v385 = vadd.f32 %v380, %v349
      %v386 = vadd.f32 %v380, %v350
      %v387 = vadd.f32 %v380, %v351
      %v388 = vadd.f32 %v380, %v352
      %v389 = vadd.f32 %v380, %v353
      %v390 = vadd.f32 %v380, %v354
      %v391 = vadd.f32 %v380, %v355
      %v392 = vadd.f32 %v380, %v356
      %v393 = vadd.f32 %v380, %v357
      %v394 = vadd.f32 %v380, %v358
      %v395 = vadd.f32 %v380, %v359
      %v396 = vadd.f32 %v380, %v360
      %v397 = vadd.f32 %v380, %v361
      %v398 = vadd.f32 %v380, %v362
      %v399 = vadd.f32 %v380, %v363
      %v400 = vadd.f32 %v380, %v364
      %v401 = vadd.f32 %v380, %v365
      %v402 = vadd.f32 %v380, %v366
      %v403 = vadd.f32 %v380, %v367
      %v404 = vadd.f32 %v380, %v368
      %v405 = vadd.f32 %v380, %v369
      %v406 = vadd.f32 %v380, %v370
      %v407 = vadd.f32 %v380, %v371
      %v408 = vadd.f32 %v380, %v372
      %v409 = vadd.f32 %v380, %v373
      %v410 = vadd.f32 %v380, %v374
      %v411 = vadd.f32 %v380, %v375
      %v412 = vadd.f32 %v380, %v376
      %413 = vset.pattern.permute.xlu0 1
      %414 = vperm.xlu0 %413, %v147
      %v415 = vpop.permute.xlu0 %414
      %417 = vset.pattern.permute.xlu0 1
      %418 = vperm.xlu0 %417, %v148
      %v419 = vpop.permute.xlu0 %418
      %421 = vset.pattern.permute.xlu0 1
      %422 = vperm.xlu0 %421, %v149
      %v423 = vpop.permute.xlu0 %422
      %425 = vset.pattern.permute.xlu0 1
      %426 = vperm.xlu0 %425, %v150
      %v427 = vpop.permute.xlu0 %426
      %429 = vset.pattern.permute.xlu0 1
      %430 = vperm.xlu0 %429, %v151
      %v431 = vpop.permute.xlu0 %430
      %433 = vset.pattern.permute.xlu0 1
      %434 = vperm.xlu0 %433, %v152
      %v435 = vpop.permute.xlu0 %434
      %437 = vset.pattern.permute.xlu0 1
      %438 = vperm.xlu0 %437, %v153
      %v439 = vpop.permute.xlu0 %438
      %441 = vset.pattern.permute.xlu0 1
      %442 = vperm.xlu0 %441, %v154
      %v443 = vpop.permute.xlu0 %442
      %445 = vset.pattern.permute.xlu0 1
      %446 = vperm.xlu0 %445, %v155
      %v447 = vpop.permute.xlu0 %446
      %449 = vset.pattern.permute.xlu0 1
      %450 = vperm.xlu0 %449, %v156
      %v451 = vpop.permute.xlu0 %450
      %453 = vset.pattern.permute.xlu0 1
      %454 = vperm.xlu0 %453, %v157
      %v455 = vpop.permute.xlu0 %454
      %457 = vset.pattern.permute.xlu0 1
      %458 = vperm.xlu0 %457, %v158
      %v459 = vpop.permute.xlu0 %458
      %461 = vset.pattern.permute.xlu0 1
      %462 = vperm.xlu0 %461, %v159
      %v463 = vpop.permute.xlu0 %462
      %465 = vset.pattern.permute.xlu0 1
      %466 = vperm.xlu0 %465, %v160
      %v467 = vpop.permute.xlu0 %466
      %469 = vset.pattern.permute.xlu0 1
      %470 = vperm.xlu0 %469, %v161
      %v471 = vpop.permute.xlu0 %470
      %473 = vset.pattern.permute.xlu0 1
      %474 = vperm.xlu0 %473, %v162
      %v475 = vpop.permute.xlu0 %474
      %477 = vset.pattern.permute.xlu0 1
      %478 = vperm.xlu0 %477, %v163
      %v479 = vpop.permute.xlu0 %478
      %481 = vset.pattern.permute.xlu0 1
      %482 = vperm.xlu0 %481, %v164
      %v483 = vpop.permute.xlu0 %482
      %485 = vset.pattern.permute.xlu0 1
      %486 = vperm.xlu0 %485, %v165
      %v487 = vpop.permute.xlu0 %486
      %489 = vset.pattern.permute.xlu0 1
      %490 = vperm.xlu0 %489, %v166
      %v491 = vpop.permute.xlu0 %490
      %493 = vset.pattern.permute.xlu0 1
      %494 = vperm.xlu0 %493, %v167
      %v495 = vpop.permute.xlu0 %494
      %497 = vset.pattern.permute.xlu0 1
      %498 = vperm.xlu0 %497, %v168
      %v499 = vpop.permute.xlu0 %498
      %501 = vset.pattern.permute.xlu0 1
      %502 = vperm.xlu0 %501, %v169
      %v503 = vpop.permute.xlu0 %502
      %505 = vset.pattern.permute.xlu0 1
      %506 = vperm.xlu0 %505, %v170
      %v507 = vpop.permute.xlu0 %506
      %509 = vset.pattern.permute.xlu0 1
      %510 = vperm.xlu0 %509, %v171
      %v511 = vpop.permute.xlu0 %510
      %513 = vset.pattern.permute.xlu0 1
      %514 = vperm.xlu0 %513, %v172
      %v515 = vpop.permute.xlu0 %514
      %517 = vset.pattern.permute.xlu0 1
      %518 = vperm.xlu0 %517, %v173
      %v519 = vpop.permute.xlu0 %518
      %521 = vset.pattern.permute.xlu0 1
      %522 = vperm.xlu0 %521, %v174
      %v523 = vpop.permute.xlu0 %522
      %525 = vset.pattern.permute.xlu0 1
      %526 = vperm.xlu0 %525, %v175
      %v527 = vpop.permute.xlu0 %526
      %529 = vset.pattern.permute.xlu0 1
      %530 = vperm.xlu0 %529, %v176
      %v531 = vpop.permute.xlu0 %530
      %533 = vset.pattern.permute.xlu0 1
      %534 = vperm.xlu0 %533, %v177
      %v535 = vpop.permute.xlu0 %534
      %537 = vset.pattern.permute.xlu0 1
      %538 = vperm.xlu0 %537, %v178
      %v539 = vpop.permute.xlu0 %538
      %v541 = vlaneseq
      %v542 = vshrl.u32 %v541, 7
      %v543 = vsub.s32 1, %v542
      %v544 = vrot.slane %v179, %v543
      %v545 = vmul.f32 %v415, %v544
      %v546 = vmul.f32 %v419, %v544
      %v547 = vmul.f32 %v423, %v544
      %v548 = vmul.f32 %v427, %v544
      %v549 = vmul.f32 %v431, %v544
      %v550 = vmul.f32 %v435, %v544
      %v551 = vmul.f32 %v439, %v544
      %v552 = vmul.f32 %v443, %v544
      %v553 = vmul.f32 %v447, %v544
      %v554 = vmul.f32 %v451, %v544
      %v555 = vmul.f32 %v455, %v544
      %v556 = vmul.f32 %v459, %v544
      %v557 = vmul.f32 %v463, %v544
      %v558 = vmul.f32 %v467, %v544
      %v559 = vmul.f32 %v471, %v544
      %v560 = vmul.f32 %v475, %v544
      %v561 = vmul.f32 %v479, %v544
      %v562 = vmul.f32 %v483, %v544
      %v563 = vmul.f32 %v487, %v544
      %v564 = vmul.f32 %v491, %v544
      %v565 = vmul.f32 %v495, %v544
      %v566 = vmul.f32 %v499, %v544
      %v567 = vmul.f32 %v503, %v544
      %v568 = vmul.f32 %v507, %v544
      %v569 = vmul.f32 %v511, %v544
      %v570 = vmul.f32 %v515, %v544
      %v571 = vmul.f32 %v519, %v544
      %v572 = vmul.f32 %v523, %v544
      %v573 = vmul.f32 %v527, %v544
      %v574 = vmul.f32 %v531, %v544
      %v575 = vmul.f32 %v535, %v544
      %v576 = vmul.f32 %v539, %v544
      %v577 = vadd.f32 %v381, %v545
      %v578 = vadd.f32 %v382, %v546
      %v579 = vadd.f32 %v383, %v547
      %v580 = vadd.f32 %v384, %v548
      %v581 = vadd.f32 %v385, %v549
      %v582 = vadd.f32 %v386, %v550
      %v583 = vadd.f32 %v387, %v551
      %v584 = vadd.f32 %v388, %v552
      %v585 = vadd.f32 %v389, %v553
      %v586 = vadd.f32 %v390, %v554
      %v587 = vadd.f32 %v391, %v555
      %v588 = vadd.f32 %v392, %v556
      %v589 = vadd.f32 %v393, %v557
      %v590 = vadd.f32 %v394, %v558
      %v591 = vadd.f32 %v395, %v559
      %v592 = vadd.f32 %v396, %v560
      %v593 = vadd.f32 %v397, %v561
      %v594 = vadd.f32 %v398, %v562
      %v595 = vadd.f32 %v399, %v563
      %v596 = vadd.f32 %v400, %v564
      %v597 = vadd.f32 %v401, %v565
      %v598 = vadd.f32 %v402, %v566
      %v599 = vadd.f32 %v403, %v567
      %v600 = vadd.f32 %v404, %v568
      %v601 = vadd.f32 %v405, %v569
      %v602 = vadd.f32 %v406, %v570
      %v603 = vadd.f32 %v407, %v571
      %v604 = vadd.f32 %v408, %v572
      %v605 = vadd.f32 %v409, %v573
      %v606 = vadd.f32 %v410, %v574
      %v607 = vadd.f32 %v411, %v575
      %v608 = vadd.f32 %v412, %v576
      %609 = vset.pattern.permute.xlu0 2
      %610 = vperm.xlu0 %609, %v147
      %v611 = vpop.permute.xlu0 %610
      %613 = vset.pattern.permute.xlu0 2
      %614 = vperm.xlu0 %613, %v148
      %v615 = vpop.permute.xlu0 %614
      %617 = vset.pattern.permute.xlu0 2
      %618 = vperm.xlu0 %617, %v149
      %v619 = vpop.permute.xlu0 %618
      %621 = vset.pattern.permute.xlu0 2
      %622 = vperm.xlu0 %621, %v150
      %v623 = vpop.permute.xlu0 %622
      %625 = vset.pattern.permute.xlu0 2
      %626 = vperm.xlu0 %625, %v151
      %v627 = vpop.permute.xlu0 %626
      %629 = vset.pattern.permute.xlu0 2
      %630 = vperm.xlu0 %629, %v152
      %v631 = vpop.permute.xlu0 %630
      %633 = vset.pattern.permute.xlu0 2
      %634 = vperm.xlu0 %633, %v153
      %v635 = vpop.permute.xlu0 %634
      %637 = vset.pattern.permute.xlu0 2
      %638 = vperm.xlu0 %637, %v154
      %v639 = vpop.permute.xlu0 %638
      %641 = vset.pattern.permute.xlu0 2
      %642 = vperm.xlu0 %641, %v155
      %v643 = vpop.permute.xlu0 %642
      %645 = vset.pattern.permute.xlu0 2
      %646 = vperm.xlu0 %645, %v156
      %v647 = vpop.permute.xlu0 %646
      %649 = vset.pattern.permute.xlu0 2
      %650 = vperm.xlu0 %649, %v157
      %v651 = vpop.permute.xlu0 %650
      %653 = vset.pattern.permute.xlu0 2
      %654 = vperm.xlu0 %653, %v158
      %v655 = vpop.permute.xlu0 %654
      %657 = vset.pattern.permute.xlu0 2
      %658 = vperm.xlu0 %657, %v159
      %v659 = vpop.permute.xlu0 %658
      %661 = vset.pattern.permute.xlu0 2
      %662 = vperm.xlu0 %661, %v160
      %v663 = vpop.permute.xlu0 %662
      %665 = vset.pattern.permute.xlu0 2
      %666 = vperm.xlu0 %665, %v161
      %v667 = vpop.permute.xlu0 %666
      %669 = vset.pattern.permute.xlu0 2
      %670 = vperm.xlu0 %669, %v162
      %v671 = vpop.permute.xlu0 %670
      %673 = vset.pattern.permute.xlu0 2
      %674 = vperm.xlu0 %673, %v163
      %v675 = vpop.permute.xlu0 %674
      %677 = vset.pattern.permute.xlu0 2
      %678 = vperm.xlu0 %677, %v164
      %v679 = vpop.permute.xlu0 %678
      %681 = vset.pattern.permute.xlu0 2
      %682 = vperm.xlu0 %681, %v165
      %v683 = vpop.permute.xlu0 %682
      %685 = vset.pattern.permute.xlu0 2
      %686 = vperm.xlu0 %685, %v166
      %v687 = vpop.permute.xlu0 %686
      %689 = vset.pattern.permute.xlu0 2
      %690 = vperm.xlu0 %689, %v167
      %v691 = vpop.permute.xlu0 %690
      %693 = vset.pattern.permute.xlu0 2
      %694 = vperm.xlu0 %693, %v168
      %v695 = vpop.permute.xlu0 %694
      %697 = vset.pattern.permute.xlu0 2
      %698 = vperm.xlu0 %697, %v169
      %v699 = vpop.permute.xlu0 %698
      %701 = vset.pattern.permute.xlu0 2
      %702 = vperm.xlu0 %701, %v170
      %v703 = vpop.permute.xlu0 %702
      %705 = vset.pattern.permute.xlu0 2
      %706 = vperm.xlu0 %705, %v171
      %v707 = vpop.permute.xlu0 %706
      %709 = vset.pattern.permute.xlu0 2
      %710 = vperm.xlu0 %709, %v172
      %v711 = vpop.permute.xlu0 %710
      %713 = vset.pattern.permute.xlu0 2
      %714 = vperm.xlu0 %713, %v173
      %v715 = vpop.permute.xlu0 %714
      %717 = vset.pattern.permute.xlu0 2
      %718 = vperm.xlu0 %717, %v174
      %v719 = vpop.permute.xlu0 %718
      %721 = vset.pattern.permute.xlu0 2
      %722 = vperm.xlu0 %721, %v175
      %v723 = vpop.permute.xlu0 %722
      %725 = vset.pattern.permute.xlu0 2
      %726 = vperm.xlu0 %725, %v176
      %v727 = vpop.permute.xlu0 %726
      %729 = vset.pattern.permute.xlu0 2
      %730 = vperm.xlu0 %729, %v177
      %v731 = vpop.permute.xlu0 %730
      %733 = vset.pattern.permute.xlu0 2
      %734 = vperm.xlu0 %733, %v178
      %v735 = vpop.permute.xlu0 %734
      %v737 = vlaneseq
      %v738 = vshrl.u32 %v737, 7
      %v739 = vsub.s32 2, %v738
      %v740 = vrot.slane %v179, %v739
      %v741 = vmul.f32 %v611, %v740
      %v742 = vmul.f32 %v615, %v740
      %v743 = vmul.f32 %v619, %v740
      %v744 = vmul.f32 %v623, %v740
      %v745 = vmul.f32 %v627, %v740
      %v746 = vmul.f32 %v631, %v740
      %v747 = vmul.f32 %v635, %v740
      %v748 = vmul.f32 %v639, %v740
      %v749 = vmul.f32 %v643, %v740
      %v750 = vmul.f32 %v647, %v740
      %v751 = vmul.f32 %v651, %v740
      %v752 = vmul.f32 %v655, %v740
      %v753 = vmul.f32 %v659, %v740
      %v754 = vmul.f32 %v663, %v740
      %v755 = vmul.f32 %v667, %v740
      %v756 = vmul.f32 %v671, %v740
      %v757 = vmul.f32 %v675, %v740
      %v758 = vmul.f32 %v679, %v740
      %v759 = vmul.f32 %v683, %v740
      %v760 = vmul.f32 %v687, %v740
      %v761 = vmul.f32 %v691, %v740
      %v762 = vmul.f32 %v695, %v740
      %v763 = vmul.f32 %v699, %v740
      %v764 = vmul.f32 %v703, %v740
      %v765 = vmul.f32 %v707, %v740
      %v766 = vmul.f32 %v711, %v740
      %v767 = vmul.f32 %v715, %v740
      %v768 = vmul.f32 %v719, %v740
      %v769 = vmul.f32 %v723, %v740
      %v770 = vmul.f32 %v727, %v740
      %v771 = vmul.f32 %v731, %v740
      %v772 = vmul.f32 %v735, %v740
      %v773 = vadd.f32 %v577, %v741
      %v774 = vadd.f32 %v578, %v742
      %v775 = vadd.f32 %v579, %v743
      %v776 = vadd.f32 %v580, %v744
      %v777 = vadd.f32 %v581, %v745
      %v778 = vadd.f32 %v582, %v746
      %v779 = vadd.f32 %v583, %v747
      %v780 = vadd.f32 %v584, %v748
      %v781 = vadd.f32 %v585, %v749
      %v782 = vadd.f32 %v586, %v750
      %v783 = vadd.f32 %v587, %v751
      %v784 = vadd.f32 %v588, %v752
      %v785 = vadd.f32 %v589, %v753
      %v786 = vadd.f32 %v590, %v754
      %v787 = vadd.f32 %v591, %v755
      %v788 = vadd.f32 %v592, %v756
      %v789 = vadd.f32 %v593, %v757
      %v790 = vadd.f32 %v594, %v758
      %v791 = vadd.f32 %v595, %v759
      %v792 = vadd.f32 %v596, %v760
      %v793 = vadd.f32 %v597, %v761
      %v794 = vadd.f32 %v598, %v762
      %v795 = vadd.f32 %v599, %v763
      %v796 = vadd.f32 %v600, %v764
      %v797 = vadd.f32 %v601, %v765
      %v798 = vadd.f32 %v602, %v766
      %v799 = vadd.f32 %v603, %v767
      %v800 = vadd.f32 %v604, %v768
      %v801 = vadd.f32 %v605, %v769
      %v802 = vadd.f32 %v606, %v770
      %v803 = vadd.f32 %v607, %v771
      %v804 = vadd.f32 %v608, %v772
      %805 = vset.pattern.permute.xlu0 3
      %806 = vperm.xlu0 %805, %v147
      %v807 = vpop.permute.xlu0 %806
      %809 = vset.pattern.permute.xlu0 3
      %810 = vperm.xlu0 %809, %v148
      %v811 = vpop.permute.xlu0 %810
      %813 = vset.pattern.permute.xlu0 3
      %814 = vperm.xlu0 %813, %v149
      %v815 = vpop.permute.xlu0 %814
      %817 = vset.pattern.permute.xlu0 3
      %818 = vperm.xlu0 %817, %v150
      %v819 = vpop.permute.xlu0 %818
      %821 = vset.pattern.permute.xlu0 3
      %822 = vperm.xlu0 %821, %v151
      %v823 = vpop.permute.xlu0 %822
      %825 = vset.pattern.permute.xlu0 3
      %826 = vperm.xlu0 %825, %v152
      %v827 = vpop.permute.xlu0 %826
      %829 = vset.pattern.permute.xlu0 3
      %830 = vperm.xlu0 %829, %v153
      %v831 = vpop.permute.xlu0 %830
      %833 = vset.pattern.permute.xlu0 3
      %834 = vperm.xlu0 %833, %v154
      %v835 = vpop.permute.xlu0 %834
      %837 = vset.pattern.permute.xlu0 3
      %838 = vperm.xlu0 %837, %v155
      %v839 = vpop.permute.xlu0 %838
      %841 = vset.pattern.permute.xlu0 3
      %842 = vperm.xlu0 %841, %v156
      %v843 = vpop.permute.xlu0 %842
      %845 = vset.pattern.permute.xlu0 3
      %846 = vperm.xlu0 %845, %v157
      %v847 = vpop.permute.xlu0 %846
      %849 = vset.pattern.permute.xlu0 3
      %850 = vperm.xlu0 %849, %v158
      %v851 = vpop.permute.xlu0 %850
      %853 = vset.pattern.permute.xlu0 3
      %854 = vperm.xlu0 %853, %v159
      %v855 = vpop.permute.xlu0 %854
      %857 = vset.pattern.permute.xlu0 3
      %858 = vperm.xlu0 %857, %v160
      %v859 = vpop.permute.xlu0 %858
      %861 = vset.pattern.permute.xlu0 3
      %862 = vperm.xlu0 %861, %v161
      %v863 = vpop.permute.xlu0 %862
      %865 = vset.pattern.permute.xlu0 3
      %866 = vperm.xlu0 %865, %v162
      %v867 = vpop.permute.xlu0 %866
      %869 = vset.pattern.permute.xlu0 3
      %870 = vperm.xlu0 %869, %v163
      %v871 = vpop.permute.xlu0 %870
      %873 = vset.pattern.permute.xlu0 3
      %874 = vperm.xlu0 %873, %v164
      %v875 = vpop.permute.xlu0 %874
      %877 = vset.pattern.permute.xlu0 3
      %878 = vperm.xlu0 %877, %v165
      %v879 = vpop.permute.xlu0 %878
      %881 = vset.pattern.permute.xlu0 3
      %882 = vperm.xlu0 %881, %v166
      %v883 = vpop.permute.xlu0 %882
      %885 = vset.pattern.permute.xlu0 3
      %886 = vperm.xlu0 %885, %v167
      %v887 = vpop.permute.xlu0 %886
      %889 = vset.pattern.permute.xlu0 3
      %890 = vperm.xlu0 %889, %v168
      %v891 = vpop.permute.xlu0 %890
      %893 = vset.pattern.permute.xlu0 3
      %894 = vperm.xlu0 %893, %v169
      %v895 = vpop.permute.xlu0 %894
      %897 = vset.pattern.permute.xlu0 3
      %898 = vperm.xlu0 %897, %v170
      %v899 = vpop.permute.xlu0 %898
      %901 = vset.pattern.permute.xlu0 3
      %902 = vperm.xlu0 %901, %v171
      %v903 = vpop.permute.xlu0 %902
      %905 = vset.pattern.permute.xlu0 3
      %906 = vperm.xlu0 %905, %v172
      %v907 = vpop.permute.xlu0 %906
      %909 = vset.pattern.permute.xlu0 3
      %910 = vperm.xlu0 %909, %v173
      %v911 = vpop.permute.xlu0 %910
      %913 = vset.pattern.permute.xlu0 3
      %914 = vperm.xlu0 %913, %v174
      %v915 = vpop.permute.xlu0 %914
      %917 = vset.pattern.permute.xlu0 3
      %918 = vperm.xlu0 %917, %v175
      %v919 = vpop.permute.xlu0 %918
      %921 = vset.pattern.permute.xlu0 3
      %922 = vperm.xlu0 %921, %v176
      %v923 = vpop.permute.xlu0 %922
      %925 = vset.pattern.permute.xlu0 3
      %926 = vperm.xlu0 %925, %v177
      %v927 = vpop.permute.xlu0 %926
      %929 = vset.pattern.permute.xlu0 3
      %930 = vperm.xlu0 %929, %v178
      %v931 = vpop.permute.xlu0 %930
      %v933 = vlaneseq
      %v934 = vshrl.u32 %v933, 7
      %v935 = vsub.s32 3, %v934
      %v936 = vrot.slane %v179, %v935
      %v937 = vmul.f32 %v807, %v936
      %v938 = vmul.f32 %v811, %v936
      %v939 = vmul.f32 %v815, %v936
      %v940 = vmul.f32 %v819, %v936
      %v941 = vmul.f32 %v823, %v936
      %v942 = vmul.f32 %v827, %v936
      %v943 = vmul.f32 %v831, %v936
      %v944 = vmul.f32 %v835, %v936
      %v945 = vmul.f32 %v839, %v936
      %v946 = vmul.f32 %v843, %v936
      %v947 = vmul.f32 %v847, %v936
      %v948 = vmul.f32 %v851, %v936
      %v949 = vmul.f32 %v855, %v936
      %v950 = vmul.f32 %v859, %v936
      %v951 = vmul.f32 %v863, %v936
      %v952 = vmul.f32 %v867, %v936
      %v953 = vmul.f32 %v871, %v936
      %v954 = vmul.f32 %v875, %v936
      %v955 = vmul.f32 %v879, %v936
      %v956 = vmul.f32 %v883, %v936
      %v957 = vmul.f32 %v887, %v936
      %v958 = vmul.f32 %v891, %v936
      %v959 = vmul.f32 %v895, %v936
      %v960 = vmul.f32 %v899, %v936
      %v961 = vmul.f32 %v903, %v936
      %v962 = vmul.f32 %v907, %v936
      %v963 = vmul.f32 %v911, %v936
      %v964 = vmul.f32 %v915, %v936
      %v965 = vmul.f32 %v919, %v936
      %v966 = vmul.f32 %v923, %v936
      %v967 = vmul.f32 %v927, %v936
      %v968 = vmul.f32 %v931, %v936
      %v969 = vadd.f32 %v773, %v937
      %v970 = vadd.f32 %v774, %v938
      %v971 = vadd.f32 %v775, %v939
      %v972 = vadd.f32 %v776, %v940
      %v973 = vadd.f32 %v777, %v941
      %v974 = vadd.f32 %v778, %v942
      %v975 = vadd.f32 %v779, %v943
      %v976 = vadd.f32 %v780, %v944
      %v977 = vadd.f32 %v781, %v945
      %v978 = vadd.f32 %v782, %v946
      %v979 = vadd.f32 %v783, %v947
      %v980 = vadd.f32 %v784, %v948
      %v981 = vadd.f32 %v785, %v949
      %v982 = vadd.f32 %v786, %v950
      %v983 = vadd.f32 %v787, %v951
      %v984 = vadd.f32 %v788, %v952
      %v985 = vadd.f32 %v789, %v953
      %v986 = vadd.f32 %v790, %v954
      %v987 = vadd.f32 %v791, %v955
      %v988 = vadd.f32 %v792, %v956
      %v989 = vadd.f32 %v793, %v957
      %v990 = vadd.f32 %v794, %v958
      %v991 = vadd.f32 %v795, %v959
      %v992 = vadd.f32 %v796, %v960
      %v993 = vadd.f32 %v797, %v961
      %v994 = vadd.f32 %v798, %v962
      %v995 = vadd.f32 %v799, %v963
      %v996 = vadd.f32 %v800, %v964
      %v997 = vadd.f32 %v801, %v965
      %v998 = vadd.f32 %v802, %v966
      %v999 = vadd.f32 %v803, %v967
      %v1000 = vadd.f32 %v804, %v968
      %v1001 = vmax.f32 %v969, 0.0
      %v1002 = vmax.f32 %v970, 0.0
      %v1003 = vmax.f32 %v971, 0.0
      %v1004 = vmax.f32 %v972, 0.0
      %v1005 = vmax.f32 %v973, 0.0
      %v1006 = vmax.f32 %v974, 0.0
      %v1007 = vmax.f32 %v975, 0.0
      %v1008 = vmax.f32 %v976, 0.0
      %v1009 = vmax.f32 %v977, 0.0
      %v1010 = vmax.f32 %v978, 0.0
      %v1011 = vmax.f32 %v979, 0.0
      %v1012 = vmax.f32 %v980, 0.0
      %v1013 = vmax.f32 %v981, 0.0
      %v1014 = vmax.f32 %v982, 0.0
      %v1015 = vmax.f32 %v983, 0.0
      %v1016 = vmax.f32 %v984, 0.0
      %v1017 = vmax.f32 %v985, 0.0
      %v1018 = vmax.f32 %v986, 0.0
      %v1019 = vmax.f32 %v987, 0.0
      %v1020 = vmax.f32 %v988, 0.0
      %v1021 = vmax.f32 %v989, 0.0
      %v1022 = vmax.f32 %v990, 0.0
      %v1023 = vmax.f32 %v991, 0.0
      %v1024 = vmax.f32 %v992, 0.0
      %v1025 = vmax.f32 %v993, 0.0
      %v1026 = vmax.f32 %v994, 0.0
      %v1027 = vmax.f32 %v995, 0.0
      %v1028 = vmax.f32 %v996, 0.0
      %v1029 = vmax.f32 %v997, 0.0
      %v1030 = vmax.f32 %v998, 0.0
      %v1031 = vmax.f32 %v999, 0.0
      %v1032 = vmax.f32 %v1000, 0.0
      %v1033 = vld [vmem:[%s1 + $0x10] sm:$0xff]
      %v1034 = vld [vmem:[%s1 + $0x18] sm:$0xff]
      %v1035 = vld [vmem:[%s1 + $0x20] sm:$0xff]
      %v1036 = vld [vmem:[%s1 + $0x28] sm:$0xff]
      %v1037 = vld [vmem:[%s1 + $0x30] sm:$0xff]
      %v1038 = vld [vmem:[%s1 + $0x38] sm:$0xff]
      %v1039 = vld [vmem:[%s1 + $0x40] sm:$0xff]
      %v1040 = vld [vmem:[%s1 + $0x48] sm:$0xff]
      %v1041 = vld [vmem:[%s1 + $0x50] sm:$0x1]
      %v1042 = vlaneseq
      %v1043 = vshrl.u32 %v1042, 7
      %v1044 = vsub.s32 0, %v1043
      %v1045 = vrot.slane %v1041, %v1044
      %vm1046 = vcmask 523264
      %v1048 = vsel %vm1046, %v1001, 0
      %v1051 = vsel %vm1046, %v1002, 0
      %v1054 = vsel %vm1046, %v1003, 0
      %v1057 = vsel %vm1046, %v1004, 0
      %v1060 = vsel %vm1046, %v1005, 0
      %v1063 = vsel %vm1046, %v1006, 0
      %v1066 = vsel %vm1046, %v1007, 0
      %v1069 = vsel %vm1046, %v1008, 0
      %v1072 = vsel %vm1046, %v1009, 0
      %v1075 = vsel %vm1046, %v1010, 0
      %v1078 = vsel %vm1046, %v1011, 0
      %v1081 = vsel %vm1046, %v1012, 0
      %v1084 = vsel %vm1046, %v1013, 0
      %v1087 = vsel %vm1046, %v1014, 0
      %v1090 = vsel %vm1046, %v1015, 0
      %v1093 = vsel %vm1046, %v1016, 0
      %v1096 = vsel %vm1046, %v1017, 0
      %v1099 = vsel %vm1046, %v1018, 0
      %v1102 = vsel %vm1046, %v1019, 0
      %v1105 = vsel %vm1046, %v1020, 0
      %v1108 = vsel %vm1046, %v1021, 0
      %v1111 = vsel %vm1046, %v1022, 0
      %v1114 = vsel %vm1046, %v1023, 0
      %v1117 = vsel %vm1046, %v1024, 0
      %v1120 = vsel %vm1046, %v1025, 0
      %v1123 = vsel %vm1046, %v1026, 0
      %v1126 = vsel %vm1046, %v1027, 0
      %v1129 = vsel %vm1046, %v1028, 0
      %v1132 = vsel %vm1046, %v1029, 0
      %v1135 = vsel %vm1046, %v1030, 0
      %v1138 = vsel %vm1046, %v1031, 0
      %v1141 = vsel %vm1046, %v1032, 0
      %1143 = vmatprep.subr.mxu0 0.0
      %1144 = vmatpush1.msra.mxu0 0.0
      %1145 = vmatprep.subr.mxu0 0.0
      %1146 = vmatpush1.msra.mxu0 0.0
      %1147 = vmatprep.subr.mxu0 0.0
      %1148 = vmatpush1.msra.mxu0 0.0
      %1149 = vmatprep.subr.mxu0 0.0
      %1150 = vmatpush1.msra.mxu0 0.0
      %1151 = vmatprep.subr.mxu0 0.0
      %1152 = vmatpush1.msra.mxu0 0.0
      %1153 = vmatprep.subr.mxu0 0.0
      %1154 = vmatpush1.msra.mxu0 0.0
      %1155 = vmatprep.subr.mxu0 0.0
      %1156 = vmatpush1.msra.mxu0 0.0
      %1157 = vmatprep.subr.mxu0 0.0
      %1158 = vmatpush1.msra.mxu0 0.0
      %1159 = vmatprep.subr.mxu0 0.0
      %1160 = vmatpush1.msra.mxu0 %v1040
      %1161 = vmatprep.subr.mxu0 0.0
      %1162 = vmatpush1.msra.mxu0 %v1039
      %1163 = vmatprep.subr.mxu0 0.0
      %1164 = vmatpush1.msra.mxu0 %v1038
      %1165 = vmatprep.subr.mxu0 0.0
      %1166 = vmatpush1.msra.mxu0 %v1037
      %1167 = vmatprep.subr.mxu0 0.0
      %1168 = vmatpush1.msra.mxu0 %v1036
      %1169 = vmatprep.subr.mxu0 0.0
      %1170 = vmatpush1.msra.mxu0 %v1035
      %1171 = vmatprep.subr.mxu0 0.0
      %1172 = vmatpush1.msra.mxu0 %v1034
      %1173 = vmatprep.subr.mxu0 0.0
      %1174 = vmatpush1.msra.mxu0 %v1033
      %1175 = vmatprep.subr.mxu0 0.0
      %1176 = vmatpush2.msra.mxu0 0.0
      %1177 = vmatprep.subr.mxu0 0.0
      %1178 = vmatpush2.msra.mxu0 0.0
      %1179 = vmatprep.subr.mxu0 0.0
      %1180 = vmatpush2.msra.mxu0 0.0
      %1181 = vmatprep.subr.mxu0 0.0
      %1182 = vmatpush2.msra.mxu0 0.0
      %1183 = vmatprep.subr.mxu0 0.0
      %1184 = vmatpush2.msra.mxu0 0.0
      %1185 = vmatprep.subr.mxu0 0.0
      %1186 = vmatpush2.msra.mxu0 0.0
      %1187 = vmatprep.subr.mxu0 0.0
      %1188 = vmatpush2.msra.mxu0 0.0
      %1189 = vmatprep.subr.mxu0 0.0
      %1190 = vmatpush2.msra.mxu0 0.0
      %1191 = vmatprep.subr.mxu0 0.0
      %1192 = vmatpush2.msra.mxu0 0.0
      %1193 = vmatprep.subr.mxu0 0.0
      %1194 = vmatpush2.msra.mxu0 0.0
      %1195 = vmatprep.subr.mxu0 0.0
      %1196 = vmatpush2.msra.mxu0 0.0
      %1197 = vmatprep.subr.mxu0 0.0
      %1198 = vmatpush2.msra.mxu0 0.0
      %1199 = vmatprep.subr.mxu0 0.0
      %1200 = vmatpush2.msra.mxu0 0.0
      %1201 = vmatprep.subr.mxu0 0.0
      %1202 = vmatpush2.msra.mxu0 0.0
      %1203 = vmatprep.subr.mxu0 0.0
      %1204 = vmatpush2.msra.mxu0 0.0
      %1205 = vmatprep.subr.mxu0 0.0
      %1206 = vmatpush2.msra.mxu0 0.0
      %1207 = vmatprep.mubr.f32.mxu0 0.0
      %1208 = vmatmul.mubr.f32.gmra.mxu0 %v1048
      %v1209 = vpop.f32.mrf.mxu0
      %v1210 = vadd.f32 %v1045, %v1209
      %v1211 = vpop.f32.mrf.mxu0
      %1212 = vmatprep.mubr.f32.mxu0 0.0
      %1213 = vmatmul.mubr.f32.gmra.mxu0 %v1051
      %v1214 = vpop.f32.mrf.mxu0
      %v1215 = vadd.f32 %v1045, %v1214
      %v1216 = vpop.f32.mrf.mxu0
      %1217 = vmatprep.mubr.f32.mxu0 0.0
      %1218 = vmatmul.mubr.f32.gmra.mxu0 %v1054
      %v1219 = vpop.f32.mrf.mxu0
      %v1220 = vadd.f32 %v1045, %v1219
      %v1221 = vpop.f32.mrf.mxu0
      %1222 = vmatprep.mubr.f32.mxu0 0.0
      %1223 = vmatmul.mubr.f32.gmra.mxu0 %v1057
      %v1224 = vpop.f32.mrf.mxu0
      %v1225 = vadd.f32 %v1045, %v1224
      %v1226 = vpop.f32.mrf.mxu0
      %1227 = vmatprep.mubr.f32.mxu0 0.0
      %1228 = vmatmul.mubr.f32.gmra.mxu0 %v1060
      %v1229 = vpop.f32.mrf.mxu0
      %v1230 = vadd.f32 %v1045, %v1229
      %v1231 = vpop.f32.mrf.mxu0
      %1232 = vmatprep.mubr.f32.mxu0 0.0
      %1233 = vmatmul.mubr.f32.gmra.mxu0 %v1063
      %v1234 = vpop.f32.mrf.mxu0
      %v1235 = vadd.f32 %v1045, %v1234
      %v1236 = vpop.f32.mrf.mxu0
      %1237 = vmatprep.mubr.f32.mxu0 0.0
      %1238 = vmatmul.mubr.f32.gmra.mxu0 %v1066
      %v1239 = vpop.f32.mrf.mxu0
      %v1240 = vadd.f32 %v1045, %v1239
      %v1241 = vpop.f32.mrf.mxu0
      %1242 = vmatprep.mubr.f32.mxu0 0.0
      %1243 = vmatmul.mubr.f32.gmra.mxu0 %v1069
      %v1244 = vpop.f32.mrf.mxu0
      %v1245 = vadd.f32 %v1045, %v1244
      %v1246 = vpop.f32.mrf.mxu0
      %1247 = vmatprep.mubr.f32.mxu0 0.0
      %1248 = vmatmul.mubr.f32.gmra.mxu0 %v1072
      %v1249 = vpop.f32.mrf.mxu0
      %v1250 = vadd.f32 %v1045, %v1249
      %v1251 = vpop.f32.mrf.mxu0
      %1252 = vmatprep.mubr.f32.mxu0 0.0
      %1253 = vmatmul.mubr.f32.gmra.mxu0 %v1075
      %v1254 = vpop.f32.mrf.mxu0
      %v1255 = vadd.f32 %v1045, %v1254
      %v1256 = vpop.f32.mrf.mxu0
      %1257 = vmatprep.mubr.f32.mxu0 0.0
      %1258 = vmatmul.mubr.f32.gmra.mxu0 %v1078
      %v1259 = vpop.f32.mrf.mxu0
      %v1260 = vadd.f32 %v1045, %v1259
      %v1261 = vpop.f32.mrf.mxu0
      %1262 = vmatprep.mubr.f32.mxu0 0.0
      %1263 = vmatmul.mubr.f32.gmra.mxu0 %v1081
      %v1264 = vpop.f32.mrf.mxu0
      %v1265 = vadd.f32 %v1045, %v1264
      %v1266 = vpop.f32.mrf.mxu0
      %1267 = vmatprep.mubr.f32.mxu0 0.0
      %1268 = vmatmul.mubr.f32.gmra.mxu0 %v1084
      %v1269 = vpop.f32.mrf.mxu0
      %v1270 = vadd.f32 %v1045, %v1269
      %v1271 = vpop.f32.mrf.mxu0
      %1272 = vmatprep.mubr.f32.mxu0 0.0
      %1273 = vmatmul.mubr.f32.gmra.mxu0 %v1087
      %v1274 = vpop.f32.mrf.mxu0
      %v1275 = vadd.f32 %v1045, %v1274
      %v1276 = vpop.f32.mrf.mxu0
      %1277 = vmatprep.mubr.f32.mxu0 0.0
      %1278 = vmatmul.mubr.f32.gmra.mxu0 %v1090
      %v1279 = vpop.f32.mrf.mxu0
      %v1280 = vadd.f32 %v1045, %v1279
      %v1281 = vpop.f32.mrf.mxu0
      %1282 = vmatprep.mubr.f32.mxu0 0.0
      %1283 = vmatmul.mubr.f32.gmra.mxu0 %v1093
      %v1284 = vpop.f32.mrf.mxu0
      %v1285 = vadd.f32 %v1045, %v1284
      %v1286 = vpop.f32.mrf.mxu0
      %1287 = vmatprep.mubr.f32.mxu0 0.0
      %1288 = vmatmul.mubr.f32.gmra.mxu0 %v1096
      %v1289 = vpop.f32.mrf.mxu0
      %v1290 = vadd.f32 %v1045, %v1289
      %v1291 = vpop.f32.mrf.mxu0
      %1292 = vmatprep.mubr.f32.mxu0 0.0
      %1293 = vmatmul.mubr.f32.gmra.mxu0 %v1099
      %v1294 = vpop.f32.mrf.mxu0
      %v1295 = vadd.f32 %v1045, %v1294
      %v1296 = vpop.f32.mrf.mxu0
      %1297 = vmatprep.mubr.f32.mxu0 0.0
      %1298 = vmatmul.mubr.f32.gmra.mxu0 %v1102
      %v1299 = vpop.f32.mrf.mxu0
      %v1300 = vadd.f32 %v1045, %v1299
      %v1301 = vpop.f32.mrf.mxu0
      %1302 = vmatprep.mubr.f32.mxu0 0.0
      %1303 = vmatmul.mubr.f32.gmra.mxu0 %v1105
      %v1304 = vpop.f32.mrf.mxu0
      %v1305 = vadd.f32 %v1045, %v1304
      %v1306 = vpop.f32.mrf.mxu0
      %1307 = vmatprep.mubr.f32.mxu0 0.0
      %1308 = vmatmul.mubr.f32.gmra.mxu0 %v1108
      %v1309 = vpop.f32.mrf.mxu0
      %v1310 = vadd.f32 %v1045, %v1309
      %v1311 = vpop.f32.mrf.mxu0
      %1312 = vmatprep.mubr.f32.mxu0 0.0
      %1313 = vmatmul.mubr.f32.gmra.mxu0 %v1111
      %v1314 = vpop.f32.mrf.mxu0
      %v1315 = vadd.f32 %v1045, %v1314
      %v1316 = vpop.f32.mrf.mxu0
      %1317 = vmatprep.mubr.f32.mxu0 0.0
      %1318 = vmatmul.mubr.f32.gmra.mxu0 %v1114
      %v1319 = vpop.f32.mrf.mxu0
      %v1320 = vadd.f32 %v1045, %v1319
      %v1321 = vpop.f32.mrf.mxu0
      %1322 = vmatprep.mubr.f32.mxu0 0.0
      %1323 = vmatmul.mubr.f32.gmra.mxu0 %v1117
      %v1324 = vpop.f32.mrf.mxu0
      %v1325 = vadd.f32 %v1045, %v1324
      %v1326 = vpop.f32.mrf.mxu0
      %1327 = vmatprep.mubr.f32.mxu0 0.0
      %1328 = vmatmul.mubr.f32.gmra.mxu0 %v1120
      %v1329 = vpop.f32.mrf.mxu0
      %v1330 = vadd.f32 %v1045, %v1329
      %v1331 = vpop.f32.mrf.mxu0
      %1332 = vmatprep.mubr.f32.mxu0 0.0
      %1333 = vmatmul.mubr.f32.gmra.mxu0 %v1123
      %v1334 = vpop.f32.mrf.mxu0
      %v1335 = vadd.f32 %v1045, %v1334
      %v1336 = vpop.f32.mrf.mxu0
      %1337 = vmatprep.mubr.f32.mxu0 0.0
      %1338 = vmatmul.mubr.f32.gmra.mxu0 %v1126
      %v1339 = vpop.f32.mrf.mxu0
      %v1340 = vadd.f32 %v1045, %v1339
      %v1341 = vpop.f32.mrf.mxu0
      %1342 = vmatprep.mubr.f32.mxu0 0.0
      %1343 = vmatmul.mubr.f32.gmra.mxu0 %v1129
      %v1344 = vpop.f32.mrf.mxu0
      %v1345 = vadd.f32 %v1045, %v1344
      %v1346 = vpop.f32.mrf.mxu0
      %1347 = vmatprep.mubr.f32.mxu0 0.0
      %1348 = vmatmul.mubr.f32.gmra.mxu0 %v1132
      %v1349 = vpop.f32.mrf.mxu0
      %v1350 = vadd.f32 %v1045, %v1349
      %v1351 = vpop.f32.mrf.mxu0
      %1352 = vmatprep.mubr.f32.mxu0 0.0
      %1353 = vmatmul.mubr.f32.gmra.mxu0 %v1135
      %v1354 = vpop.f32.mrf.mxu0
      %v1355 = vadd.f32 %v1045, %v1354
      %v1356 = vpop.f32.mrf.mxu0
      %1357 = vmatprep.mubr.f32.mxu0 0.0
      %1358 = vmatmul.mubr.f32.gmra.mxu0 %v1138
      %v1359 = vpop.f32.mrf.mxu0
      %v1360 = vadd.f32 %v1045, %v1359
      %v1361 = vpop.f32.mrf.mxu0
      %1362 = vmatprep.mubr.f32.mxu0 0.0
      %1363 = vmatmul.mubr.f32.gmra.mxu0 %v1141
      %v1364 = vpop.f32.mrf.mxu0
      %v1365 = vadd.f32 %v1045, %v1364
      %v1366 = vpop.f32.mrf.mxu0
      %1367 = vdwg.mxu0
      %v1368 = vmax.f32 %v1210, 0.0
      %v1369 = vmax.f32 %v1215, 0.0
      %v1370 = vmax.f32 %v1220, 0.0
      %v1371 = vmax.f32 %v1225, 0.0
      %v1372 = vmax.f32 %v1230, 0.0
      %v1373 = vmax.f32 %v1235, 0.0
      %v1374 = vmax.f32 %v1240, 0.0
      %v1375 = vmax.f32 %v1245, 0.0
      %v1376 = vmax.f32 %v1250, 0.0
      %v1377 = vmax.f32 %v1255, 0.0
      %v1378 = vmax.f32 %v1260, 0.0
      %v1379 = vmax.f32 %v1265, 0.0
      %v1380 = vmax.f32 %v1270, 0.0
      %v1381 = vmax.f32 %v1275, 0.0
      %v1382 = vmax.f32 %v1280, 0.0
      %v1383 = vmax.f32 %v1285, 0.0
      %v1384 = vmax.f32 %v1290, 0.0
      %v1385 = vmax.f32 %v1295, 0.0
      %v1386 = vmax.f32 %v1300, 0.0
      %v1387 = vmax.f32 %v1305, 0.0
      %v1388 = vmax.f32 %v1310, 0.0
      %v1389 = vmax.f32 %v1315, 0.0
      %v1390 = vmax.f32 %v1320, 0.0
      %v1391 = vmax.f32 %v1325, 0.0
      %v1392 = vmax.f32 %v1330, 0.0
      %v1393 = vmax.f32 %v1335, 0.0
      %v1394 = vmax.f32 %v1340, 0.0
      %v1395 = vmax.f32 %v1345, 0.0
      %v1396 = vmax.f32 %v1350, 0.0
      %v1397 = vmax.f32 %v1355, 0.0
      %v1398 = vmax.f32 %v1360, 0.0
      %v1399 = vmax.f32 %v1365, 0.0
      %v1400 = vld [vmem:[%s1 + $0x58] sm:$0xff]
      %v1401 = vld [vmem:[%s1 + $0x60] sm:$0xff]
      %v1402 = vld [vmem:[%s1 + $0x68] sm:$0xff]
      %v1403 = vld [vmem:[%s1 + $0x70] sm:$0xff]
      %v1404 = vld [vmem:[%s1 + $0x78] sm:$0x1]
      %v1405 = vlaneseq
      %v1406 = vshrl.u32 %v1405, 7
      %v1407 = vsub.s32 0, %v1406
      %v1408 = vrot.slane %v1404, %v1407
      %vm1409 = vcmask 261120
      %v1411 = vsel %vm1409, %v1368, 0
      %v1414 = vsel %vm1409, %v1369, 0
      %v1417 = vsel %vm1409, %v1370, 0
      %v1420 = vsel %vm1409, %v1371, 0
      %v1423 = vsel %vm1409, %v1372, 0
      %v1426 = vsel %vm1409, %v1373, 0
      %v1429 = vsel %vm1409, %v1374, 0
      %v1432 = vsel %vm1409, %v1375, 0
      %v1435 = vsel %vm1409, %v1376, 0
      %v1438 = vsel %vm1409, %v1377, 0
      %v1441 = vsel %vm1409, %v1378, 0
      %v1444 = vsel %vm1409, %v1379, 0
      %v1447 = vsel %vm1409, %v1380, 0
      %v1450 = vsel %vm1409, %v1381, 0
      %v1453 = vsel %vm1409, %v1382, 0
      %v1456 = vsel %vm1409, %v1383, 0
      %v1459 = vsel %vm1409, %v1384, 0
      %v1462 = vsel %vm1409, %v1385, 0
      %v1465 = vsel %vm1409, %v1386, 0
      %v1468 = vsel %vm1409, %v1387, 0
      %v1471 = vsel %vm1409, %v1388, 0
      %v1474 = vsel %vm1409, %v1389, 0
      %v1477 = vsel %vm1409, %v1390, 0
      %v1480 = vsel %vm1409, %v1391, 0
      %v1483 = vsel %vm1409, %v1392, 0
      %v1486 = vsel %vm1409, %v1393, 0
      %v1489 = vsel %vm1409, %v1394, 0
      %v1492 = vsel %vm1409, %v1395, 0
      %v1495 = vsel %vm1409, %v1396, 0
      %v1498 = vsel %vm1409, %v1397, 0
      %v1501 = vsel %vm1409, %v1398, 0
      %v1504 = vsel %vm1409, %v1399, 0
      %1506 = vmatprep.subr.mxu0 0.0
      %1507 = vmatpush1.msra.mxu0 0.0
      %1508 = vmatprep.subr.mxu0 0.0
      %1509 = vmatpush1.msra.mxu0 0.0
      %1510 = vmatprep.subr.mxu0 0.0
      %1511 = vmatpush1.msra.mxu0 0.0
      %1512 = vmatprep.subr.mxu0 0.0
      %1513 = vmatpush1.msra.mxu0 0.0
      %1514 = vmatprep.subr.mxu0 0.0
      %1515 = vmatpush1.msra.mxu0 0.0
      %1516 = vmatprep.subr.mxu0 0.0
      %1517 = vmatpush1.msra.mxu0 0.0
      %1518 = vmatprep.subr.mxu0 0.0
      %1519 = vmatpush1.msra.mxu0 0.0
      %1520 = vmatprep.subr.mxu0 0.0
      %1521 = vmatpush1.msra.mxu0 0.0
      %1522 = vmatprep.subr.mxu0 0.0
      %1523 = vmatpush1.msra.mxu0 0.0
      %1524 = vmatprep.subr.mxu0 0.0
      %1525 = vmatpush1.msra.mxu0 0.0
      %1526 = vmatprep.subr.mxu0 0.0
      %1527 = vmatpush1.msra.mxu0 0.0
      %1528 = vmatprep.subr.mxu0 0.0
      %1529 = vmatpush1.msra.mxu0 0.0
      %1530 = vmatprep.subr.mxu0 0.0
      %1531 = vmatpush1.msra.mxu0 %v1403
      %1532 = vmatprep.subr.mxu0 0.0
      %1533 = vmatpush1.msra.mxu0 %v1402
      %1534 = vmatprep.subr.mxu0 0.0
      %1535 = vmatpush1.msra.mxu0 %v1401
      %1536 = vmatprep.subr.mxu0 0.0
      %1537 = vmatpush1.msra.mxu0 %v1400
      %1538 = vmatprep.subr.mxu0 0.0
      %1539 = vmatpush2.msra.mxu0 0.0
      %1540 = vmatprep.subr.mxu0 0.0
      %1541 = vmatpush2.msra.mxu0 0.0
      %1542 = vmatprep.subr.mxu0 0.0
      %1543 = vmatpush2.msra.mxu0 0.0
      %1544 = vmatprep.subr.mxu0 0.0
      %1545 = vmatpush2.msra.mxu0 0.0
      %1546 = vmatprep.subr.mxu0 0.0
      %1547 = vmatpush2.msra.mxu0 0.0
      %1548 = vmatprep.subr.mxu0 0.0
      %1549 = vmatpush2.msra.mxu0 0.0
      %1550 = vmatprep.subr.mxu0 0.0
      %1551 = vmatpush2.msra.mxu0 0.0
      %1552 = vmatprep.subr.mxu0 0.0
      %1553 = vmatpush2.msra.mxu0 0.0
      %1554 = vmatprep.subr.mxu0 0.0
      %1555 = vmatpush2.msra.mxu0 0.0
      %1556 = vmatprep.subr.mxu0 0.0
      %1557 = vmatpush2.msra.mxu0 0.0
      %1558 = vmatprep.subr.mxu0 0.0
      %1559 = vmatpush2.msra.mxu0 0.0
      %1560 = vmatprep.subr.mxu0 0.0
      %1561 = vmatpush2.msra.mxu0 0.0
      %1562 = vmatprep.subr.mxu0 0.0
      %1563 = vmatpush2.msra.mxu0 0.0
      %1564 = vmatprep.subr.mxu0 0.0
      %1565 = vmatpush2.msra.mxu0 0.0
      %1566 = vmatprep.subr.mxu0 0.0
      %1567 = vmatpush2.msra.mxu0 0.0
      %1568 = vmatprep.subr.mxu0 0.0
      %1569 = vmatpush2.msra.mxu0 0.0
      %1570 = vmatprep.mubr.f32.mxu0 0.0
      %1571 = vmatmul.mubr.f32.gmra.mxu0 %v1411
      %v1572 = vpop.f32.mrf.mxu0
      %v1573 = vadd.f32 %v1408, %v1572
      %v1574 = vpop.f32.mrf.mxu0
      %1575 = vmatprep.mubr.f32.mxu0 0.0
      %1576 = vmatmul.mubr.f32.gmra.mxu0 %v1414
      %v1577 = vpop.f32.mrf.mxu0
      %v1578 = vadd.f32 %v1408, %v1577
      %v1579 = vpop.f32.mrf.mxu0
      %1580 = vmatprep.mubr.f32.mxu0 0.0
      %1581 = vmatmul.mubr.f32.gmra.mxu0 %v1417
      %v1582 = vpop.f32.mrf.mxu0
      %v1583 = vadd.f32 %v1408, %v1582
      %v1584 = vpop.f32.mrf.mxu0
      %1585 = vmatprep.mubr.f32.mxu0 0.0
      %1586 = vmatmul.mubr.f32.gmra.mxu0 %v1420
      %v1587 = vpop.f32.mrf.mxu0
      %v1588 = vadd.f32 %v1408, %v1587
      %v1589 = vpop.f32.mrf.mxu0
      %1590 = vmatprep.mubr.f32.mxu0 0.0
      %1591 = vmatmul.mubr.f32.gmra.mxu0 %v1423
      %v1592 = vpop.f32.mrf.mxu0
      %v1593 = vadd.f32 %v1408, %v1592
      %v1594 = vpop.f32.mrf.mxu0
      %1595 = vmatprep.mubr.f32.mxu0 0.0
      %1596 = vmatmul.mubr.f32.gmra.mxu0 %v1426
      %v1597 = vpop.f32.mrf.mxu0
      %v1598 = vadd.f32 %v1408, %v1597
      %v1599 = vpop.f32.mrf.mxu0
      %1600 = vmatprep.mubr.f32.mxu0 0.0
      %1601 = vmatmul.mubr.f32.gmra.mxu0 %v1429
      %v1602 = vpop.f32.mrf.mxu0
      %v1603 = vadd.f32 %v1408, %v1602
      %v1604 = vpop.f32.mrf.mxu0
      %1605 = vmatprep.mubr.f32.mxu0 0.0
      %1606 = vmatmul.mubr.f32.gmra.mxu0 %v1432
      %v1607 = vpop.f32.mrf.mxu0
      %v1608 = vadd.f32 %v1408, %v1607
      %v1609 = vpop.f32.mrf.mxu0
      %1610 = vmatprep.mubr.f32.mxu0 0.0
      %1611 = vmatmul.mubr.f32.gmra.mxu0 %v1435
      %v1612 = vpop.f32.mrf.mxu0
      %v1613 = vadd.f32 %v1408, %v1612
      %v1614 = vpop.f32.mrf.mxu0
      %1615 = vmatprep.mubr.f32.mxu0 0.0
      %1616 = vmatmul.mubr.f32.gmra.mxu0 %v1438
      %v1617 = vpop.f32.mrf.mxu0
      %v1618 = vadd.f32 %v1408, %v1617
      %v1619 = vpop.f32.mrf.mxu0
      %1620 = vmatprep.mubr.f32.mxu0 0.0
      %1621 = vmatmul.mubr.f32.gmra.mxu0 %v1441
      %v1622 = vpop.f32.mrf.mxu0
      %v1623 = vadd.f32 %v1408, %v1622
      %v1624 = vpop.f32.mrf.mxu0
      %1625 = vmatprep.mubr.f32.mxu0 0.0
      %1626 = vmatmul.mubr.f32.gmra.mxu0 %v1444
      %v1627 = vpop.f32.mrf.mxu0
      %v1628 = vadd.f32 %v1408, %v1627
      %v1629 = vpop.f32.mrf.mxu0
      %1630 = vmatprep.mubr.f32.mxu0 0.0
      %1631 = vmatmul.mubr.f32.gmra.mxu0 %v1447
      %v1632 = vpop.f32.mrf.mxu0
      %v1633 = vadd.f32 %v1408, %v1632
      %v1634 = vpop.f32.mrf.mxu0
      %1635 = vmatprep.mubr.f32.mxu0 0.0
      %1636 = vmatmul.mubr.f32.gmra.mxu0 %v1450
      %v1637 = vpop.f32.mrf.mxu0
      %v1638 = vadd.f32 %v1408, %v1637
      %v1639 = vpop.f32.mrf.mxu0
      %1640 = vmatprep.mubr.f32.mxu0 0.0
      %1641 = vmatmul.mubr.f32.gmra.mxu0 %v1453
      %v1642 = vpop.f32.mrf.mxu0
      %v1643 = vadd.f32 %v1408, %v1642
      %v1644 = vpop.f32.mrf.mxu0
      %1645 = vmatprep.mubr.f32.mxu0 0.0
      %1646 = vmatmul.mubr.f32.gmra.mxu0 %v1456
      %v1647 = vpop.f32.mrf.mxu0
      %v1648 = vadd.f32 %v1408, %v1647
      %v1649 = vpop.f32.mrf.mxu0
      %1650 = vmatprep.mubr.f32.mxu0 0.0
      %1651 = vmatmul.mubr.f32.gmra.mxu0 %v1459
      %v1652 = vpop.f32.mrf.mxu0
      %v1653 = vadd.f32 %v1408, %v1652
      %v1654 = vpop.f32.mrf.mxu0
      %1655 = vmatprep.mubr.f32.mxu0 0.0
      %1656 = vmatmul.mubr.f32.gmra.mxu0 %v1462
      %v1657 = vpop.f32.mrf.mxu0
      %v1658 = vadd.f32 %v1408, %v1657
      %v1659 = vpop.f32.mrf.mxu0
      %1660 = vmatprep.mubr.f32.mxu0 0.0
      %1661 = vmatmul.mubr.f32.gmra.mxu0 %v1465
      %v1662 = vpop.f32.mrf.mxu0
      %v1663 = vadd.f32 %v1408, %v1662
      %v1664 = vpop.f32.mrf.mxu0
      %1665 = vmatprep.mubr.f32.mxu0 0.0
      %1666 = vmatmul.mubr.f32.gmra.mxu0 %v1468
      %v1667 = vpop.f32.mrf.mxu0
      %v1668 = vadd.f32 %v1408, %v1667
      %v1669 = vpop.f32.mrf.mxu0
      %1670 = vmatprep.mubr.f32.mxu0 0.0
      %1671 = vmatmul.mubr.f32.gmra.mxu0 %v1471
      %v1672 = vpop.f32.mrf.mxu0
      %v1673 = vadd.f32 %v1408, %v1672
      %v1674 = vpop.f32.mrf.mxu0
      %1675 = vmatprep.mubr.f32.mxu0 0.0
      %1676 = vmatmul.mubr.f32.gmra.mxu0 %v1474
      %v1677 = vpop.f32.mrf.mxu0
      %v1678 = vadd.f32 %v1408, %v1677
      %v1679 = vpop.f32.mrf.mxu0
      %1680 = vmatprep.mubr.f32.mxu0 0.0
      %1681 = vmatmul.mubr.f32.gmra.mxu0 %v1477
      %v1682 = vpop.f32.mrf.mxu0
      %v1683 = vadd.f32 %v1408, %v1682
      %v1684 = vpop.f32.mrf.mxu0
      %1685 = vmatprep.mubr.f32.mxu0 0.0
      %1686 = vmatmul.mubr.f32.gmra.mxu0 %v1480
      %v1687 = vpop.f32.mrf.mxu0
      %v1688 = vadd.f32 %v1408, %v1687
      %v1689 = vpop.f32.mrf.mxu0
      %1690 = vmatprep.mubr.f32.mxu0 0.0
      %1691 = vmatmul.mubr.f32.gmra.mxu0 %v1483
      %v1692 = vpop.f32.mrf.mxu0
      %v1693 = vadd.f32 %v1408, %v1692
      %v1694 = vpop.f32.mrf.mxu0
      %1695 = vmatprep.mubr.f32.mxu0 0.0
      %1696 = vmatmul.mubr.f32.gmra.mxu0 %v1486
      %v1697 = vpop.f32.mrf.mxu0
      %v1698 = vadd.f32 %v1408, %v1697
      %v1699 = vpop.f32.mrf.mxu0
      %1700 = vmatprep.mubr.f32.mxu0 0.0
      %1701 = vmatmul.mubr.f32.gmra.mxu0 %v1489
      %v1702 = vpop.f32.mrf.mxu0
      %v1703 = vadd.f32 %v1408, %v1702
      %v1704 = vpop.f32.mrf.mxu0
      %1705 = vmatprep.mubr.f32.mxu0 0.0
      %1706 = vmatmul.mubr.f32.gmra.mxu0 %v1492
      %v1707 = vpop.f32.mrf.mxu0
      %v1708 = vadd.f32 %v1408, %v1707
      %v1709 = vpop.f32.mrf.mxu0
      %1710 = vmatprep.mubr.f32.mxu0 0.0
      %1711 = vmatmul.mubr.f32.gmra.mxu0 %v1495
      %v1712 = vpop.f32.mrf.mxu0
      %v1713 = vadd.f32 %v1408, %v1712
      %v1714 = vpop.f32.mrf.mxu0
      %1715 = vmatprep.mubr.f32.mxu0 0.0
      %1716 = vmatmul.mubr.f32.gmra.mxu0 %v1498
      %v1717 = vpop.f32.mrf.mxu0
      %v1718 = vadd.f32 %v1408, %v1717
      %v1719 = vpop.f32.mrf.mxu0
      %1720 = vmatprep.mubr.f32.mxu0 0.0
      %1721 = vmatmul.mubr.f32.gmra.mxu0 %v1501
      %v1722 = vpop.f32.mrf.mxu0
      %v1723 = vadd.f32 %v1408, %v1722
      %v1724 = vpop.f32.mrf.mxu0
      %1725 = vmatprep.mubr.f32.mxu0 0.0
      %1726 = vmatmul.mubr.f32.gmra.mxu0 %v1504
      %v1727 = vpop.f32.mrf.mxu0
      %v1728 = vadd.f32 %v1408, %v1727
      %v1729 = vpop.f32.mrf.mxu0
      %1730 = vdwg.mxu0
      %vm1731 = vcmask 23552
      %1732 = vst.msk [vmem:[%s145] sm:$0xff] %vm1731, %v1573
      %1733 = vst.msk [vmem:[%s145 + $0x8] sm:$0xff] %vm1731, %v1578
      %1734 = vst.msk [vmem:[%s145 + $0x10] sm:$0xff] %vm1731, %v1583
      %1735 = vst.msk [vmem:[%s145 + $0x18] sm:$0xff] %vm1731, %v1588
      %1736 = vst.msk [vmem:[%s145 + $0x20] sm:$0xff] %vm1731, %v1593
      %1737 = vst.msk [vmem:[%s145 + $0x28] sm:$0xff] %vm1731, %v1598
      %1738 = vst.msk [vmem:[%s145 + $0x30] sm:$0xff] %vm1731, %v1603
      %1739 = vst.msk [vmem:[%s145 + $0x38] sm:$0xff] %vm1731, %v1608
      %1740 = vst.msk [vmem:[%s145 + $0x40] sm:$0xff] %vm1731, %v1613
      %1741 = vst.msk [vmem:[%s145 + $0x48] sm:$0xff] %vm1731, %v1618
      %1742 = vst.msk [vmem:[%s145 + $0x50] sm:$0xff] %vm1731, %v1623
      %1743 = vst.msk [vmem:[%s145 + $0x58] sm:$0xff] %vm1731, %v1628
      %1744 = vst.msk [vmem:[%s145 + $0x60] sm:$0xff] %vm1731, %v1633
      %1745 = vst.msk [vmem:[%s145 + $0x68] sm:$0xff] %vm1731, %v1638
      %1746 = vst.msk [vmem:[%s145 + $0x70] sm:$0xff] %vm1731, %v1643
      %1747 = vst.msk [vmem:[%s145 + $0x78] sm:$0xff] %vm1731, %v1648
      %1748 = vst.msk [vmem:[%s145 + $0x80] sm:$0xff] %vm1731, %v1653
      %1749 = vst.msk [vmem:[%s145 + $0x88] sm:$0xff] %vm1731, %v1658
      %1750 = vst.msk [vmem:[%s145 + $0x90] sm:$0xff] %vm1731, %v1663
      %1751 = vst.msk [vmem:[%s145 + $0x98] sm:$0xff] %vm1731, %v1668
      %1752 = vst.msk [vmem:[%s145 + $0xa0] sm:$0xff] %vm1731, %v1673
      %1753 = vst.msk [vmem:[%s145 + $0xa8] sm:$0xff] %vm1731, %v1678
      %1754 = vst.msk [vmem:[%s145 + $0xb0] sm:$0xff] %vm1731, %v1683
      %1755 = vst.msk [vmem:[%s145 + $0xb8] sm:$0xff] %vm1731, %v1688
      %1756 = vst.msk [vmem:[%s145 + $0xc0] sm:$0xff] %vm1731, %v1693
      %1757 = vst.msk [vmem:[%s145 + $0xc8] sm:$0xff] %vm1731, %v1698
      %1758 = vst.msk [vmem:[%s145 + $0xd0] sm:$0xff] %vm1731, %v1703
      %1759 = vst.msk [vmem:[%s145 + $0xd8] sm:$0xff] %vm1731, %v1708
      %1760 = vst.msk [vmem:[%s145 + $0xe0] sm:$0xff] %vm1731, %v1713
      %1761 = vst.msk [vmem:[%s145 + $0xe8] sm:$0xff] %vm1731, %v1718
      %1762 = vst.msk [vmem:[%s145 + $0xf0] sm:$0xff] %vm1731, %v1723
      %1763 = vst.msk [vmem:[%s145 + $0xf8] sm:$0xff] %vm1731, %v1728
      %s1764 = smul.u32 32, %s13
      %p1765 = scmp.lt.s32.totalorder %s1764, 127
      %s1766 = scalar_select %p1765, %s1764, 127
      %s1767 = smul.addr %s1766, 8
      %s1768 = scalar_lea.vmem %s2, %s1767
      // Predicated region
      $region29: #{residual_mlp_forward.1} parent=27 // pred_check
        %p1769 = pneg %p78
      $region30: #{residual_mlp_forward.1} parent=27 // pred_check_branch
        %1771 = sbr.rel (%p1769) target = $region32
      $region31: #{residual_mlp_forward.1} parent=27 // pred_region
        %s1772 = smul.u32 32, %s13
      $region32: #{residual_mlp_forward.1} parent=27 // pred_fallthru
        _
    $region28: #{residual_mlp_forward.1} parent=5 // pred_fallthru
      _
    %p1773 = scmp.le.s32.totalorder 2, %s8
    // Predicated region
    $region33: #{residual_mlp_forward.1} parent=5 // pred_check
      %p1774 = pneg %p1773
    $region34: #{residual_mlp_forward.1} parent=5 // pred_check_branch
      %1776 = sbr.rel (%p1774) target = $region36
    $region35: #{residual_mlp_forward.1} parent=5 // pred_region
      %s1777 = ssub.s32 %s8, 2
      // Predicated region
      $region37: #{residual_mlp_forward.1} parent=35 // pred_check
        %p1778 = pneg %p84
      $region38: #{residual_mlp_forward.1} parent=35 // pred_check_branch
        %1780 = sbr.rel (%p1778) target = $region40
      $region39: #{residual_mlp_forward.1} parent=35 // pred_region
        %s1781 = smul.u32 32, %s14
        %p1782 = scmp.lt.s32.totalorder %s1781, 127
        %s1783 = scalar_select %p1782, %s1781, 127
        %s1784 = smul.addr %s1783, 8
        %s1785 = scalar_lea.vmem %s2, %s1784
      $region40: #{residual_mlp_forward.1} parent=35 // pred_fallthru
        _
    $region36: #{residual_mlp_forward.1} parent=5 // pred_fallthru
      _
  $region6: #{residual_mlp_forward.1} parent=0 // loop_footer
    %s12 = sadd.s32 1, %s8
  $region7: #{residual_mlp_forward.1} parent=0 // loop_footer_branch
    %7 = sbr.rel target = $region3
  $region8: #{residual_mlp_forward.1} parent=0 // loop_exit
    _

</llo_original>
